<compile_context>
chip_gen: v7x
topology: tpu7x:2x2x1
jax: 0.10.0
libtpu: 0.0.40
codegen_flags: <defaults>
</compile_context>

<pallas_src>
import jax
import jax.numpy as jnp
from jax.experimental import pallas as pl
from jax.experimental.pallas import tpu as pltpu


def upsample_conv_kernel(xm_ref, xh0_ref, xh1_ref, w_ref, b_ref, o_ref):
    """One (batch, row-tile, cout-tile) grid step.

    xm_ref : (1, TH,  W+2, Cin)   padded-input rows [t*TH, t*TH+TH)
    xh0_ref: (1, 1,   W+2, Cin)   halo row t*TH+TH
    xh1_ref: (1, 1,   W+2, Cin)   halo row t*TH+TH+1
    w_ref  : (2, 2, 4*Cin, TCo)   per-phase folded 2x2 kernels (K = 4*Cin)
    b_ref  : (1, TCo)             bias slice
    o_ref  : (1, 2, 2, TH, W, TCo)  output with phases (a, b) as leading dims
    """
    TH, Wp, Cin = xm_ref.shape[1], xm_ref.shape[2], xm_ref.shape[3]
    W = Wp - 2
    TCo = o_ref.shape[-1]

    # (TH+2, W+2, Cin) window = main rows + the two halo rows below them.
    xwin = jnp.concatenate([xm_ref[0], xh0_ref[0], xh1_ref[0]], axis=0)
    bias = b_ref[...].astype(jnp.float32)                       # (1, TCo)

    for a in range(2):          # output row phase  (output row = 2*i + a)
        for b in range(2):      # output col phase  (output col = 2*j + b)
            # im2col patch for this phase: 4 shifted (TH, W, Cin) windows.
            cols = []
            for dr in range(2):
                for dc in range(2):
                    win = xwin[a + dr:a + dr + TH, b + dc:b + dc + W, :]
                    cols.append(win.reshape(TH * W, Cin))
            patch = jnp.concatenate(cols, axis=1)               # (TH*W, 4*Cin)
            acc = jnp.dot(patch, w_ref[a, b],
                          preferred_element_type=jnp.float32) + bias
            o_ref[0, a, b] = acc.reshape(TH, W, TCo).astype(o_ref.dtype)


def _choose_row_tile(H, W, C, itemsize, budget_bytes=32 * 1024 * 1024):
    """Largest divisor of H whose double-buffered blocks + temps fit the budget.

    Keeps the per-step VMEM footprint well inside v7x's 64 MiB (we request a
    48 MiB scoped limit) while amortizing the ~0.35us/step grid overhead.
    """
    wp = W + 2
    tco = 256 if (C > 256 and C % 256 == 0) else C
    best = 1
    for th in range(1, H + 1):
        if H % th:
            continue
        in_b = 2 * (th + 2) * wp * C * itemsize                 # main+halo, 2x buffered
        out_b = 2 * 4 * th * W * tco * itemsize                 # output block, 2x buffered
        tmp_b = 4 * th * W * C * itemsize + th * W * tco * 4    # im2col patch + f32 acc
        if in_b + out_b + tmp_b <= budget_bytes:
            best = th
    return best


def upsample_forward(x_nchw, weight_oihw, bias, *, row_tile=None, compute_dtype=None):
    """Equivalent of UpSample.forward: nearest-2x upsample then Conv2d(C, C, 3, 1, 1)."""
    N, C, H, W = x_nchw.shape
    out_dtype = x_nchw.dtype

    # ---- weight prep (tiny): fold the nearest-2x upsample into 4 phase kernels
    w_hwio = jnp.transpose(weight_oihw, (2, 3, 1, 0))           # OIHW -> (3,3,Cin,Cout)
    # R[a, dr, kh]: which 3x3 kernel rows feed 2x2-phase row-tap dr for phase a.
    R = jnp.array([[[1., 0., 0.], [0., 1., 1.]],
                   [[1., 1., 0.], [0., 0., 1.]]], w_hwio.dtype)
    w_eff = jnp.einsum('adk,bel,klio->abdeio', R, R, w_hwio)    # (2,2,2,2,Cin,Cout)
    w_all = w_eff.reshape(2, 2, 4 * C, C)                       # per-phase K = 4*Cin
    b2 = bias.reshape(1, C)

    # ---- layout glue: NCHW -> NHWC, zero-pad the ORIGINAL H,W by 1 (cheap; the
    # 2x-upsampled tensor is never built).
    x = jnp.transpose(x_nchw, (0, 2, 3, 1))
    xp = jnp.pad(x, ((0, 0), (1, 1), (1, 1), (0, 0)))
    if compute_dtype is not None:                               # e.g. bf16 on v6e/v7x
        xp = xp.astype(compute_dtype)
        w_all = w_all.astype(compute_dtype)

    TH = row_tile if row_tile is not None else _choose_row_tile(
        H, W, C, xp.dtype.itemsize)
    assert H % TH == 0, (H, TH)
    TCo = 256 if (C > 256 and C % 256 == 0) else C              # MXU-width Cout tile
    n_row = H // TH
    n_co = C // TCo
    Wp = W + 2

    in_specs = [
        pl.BlockSpec((1, TH, Wp, C), lambda n, t, co: (n, t, 0, 0)),
        pl.BlockSpec((1, 1, Wp, C),
                     lambda n, t, co, TH=TH: (n, (t + 1) * TH, 0, 0)),
        pl.BlockSpec((1, 1, Wp, C),
                     lambda n, t, co, TH=TH: (n, (t + 1) * TH + 1, 0, 0)),
        pl.BlockSpec((2, 2, 4 * C, TCo), lambda n, t, co: (0, 0, 0, co)),
        pl.BlockSpec((1, TCo), lambda n, t, co: (0, co)),
    ]
    out_specs = pl.BlockSpec((1, 2, 2, TH, W, TCo),
                             lambda n, t, co: (n, 0, 0, t, 0, co))

    out6 = pl.pallas_call(
        upsample_conv_kernel,
        out_shape=jax.ShapeDtypeStruct((N, 2, 2, H, W, C), out_dtype),
        grid=(N, n_row, n_co),
        in_specs=in_specs,
        out_specs=out_specs,
        compiler_params=pltpu.CompilerParams(
            dimension_semantics=("parallel", "parallel", "arbitrary"),
            vmem_limit_bytes=48 * 1024 * 1024),
    )(xp, xp, xp, w_all, b2)

    # out6[n, a, b, i, j, c] = y[n, c, 2i+a, 2j+b]: one fused transpose+reshape
    # does both the phase interleave (depth-to-space) and NHWC->NCHW.
    out = jnp.transpose(out6, (0, 5, 3, 1, 4, 2)).reshape(N, C, 2 * H, 2 * W)
    return out


def make_params(in_ch, key):
    """Params matching UpSample.initialize(): xavier_uniform weight, zero bias."""
    fan_in = in_ch * 3 * 3
    fan_out = in_ch * 3 * 3
    bound = (6.0 / (fan_in + fan_out)) ** 0.5
    weight = jax.random.uniform(
        key, (in_ch, in_ch, 3, 3), jnp.float32, minval=-bound, maxval=bound)
    bias = jnp.zeros((in_ch,), jnp.float32)
    return weight, bias


if __name__ == "__main__":
    key = jax.random.PRNGKey(0)
    kx, kw, kb = jax.random.split(key, 3)

    N, C, H, W = 2, 4, 16, 16
    x = jax.random.normal(kx, (N, C, H, W), jnp.float32)
    weight, bias = make_params(C, kw)
    # Use a non-zero bias so the bias path is actually exercised by the check.
    bias = bias + 0.1 * jax.random.normal(kb, (C,), jnp.float32)

    fwd = jax.jit(upsample_forward, static_argnames=("row_tile", "compute_dtype"))
    out = fwd(x, weight, bias, row_tile=8)     # 2 row tiles -> exercises the halo path
    out = jax.block_until_ready(out)
    assert out.shape == (N, C, 2 * H, 2 * W), out.shape

    # Reference: XLA conv on the explicitly upsampled input (same semantics as
    # F.interpolate(scale_factor=2, mode='nearest') followed by Conv2d(C, C, 3, 1, 1)).
    x_up = jnp.repeat(jnp.repeat(x, 2, axis=2), 2, axis=3)
    ref = jax.lax.conv_general_dilated(
        x_up, weight, window_strides=(1, 1), padding=((1, 1), (1, 1)),
        dimension_numbers=("NCHW", "OIHW", "NCHW")) + bias.reshape(1, C, 1, 1)
    assert jnp.allclose(out, ref, atol=1e-4, rtol=1e-4), \
        float(jnp.max(jnp.abs(out - ref)))

    print("KERNEL_OK")
</pallas_src>

<mosaic_0001>
module attributes {stable_mosaic.version = 11 : i64} {
  func.func @upsample_conv_kernel(%arg0: i32, %arg1: i32, %arg2: i32, %arg3: memref<1x8x18x4xf32, #tpu.memory_space<vmem>>, %arg4: memref<1x1x18x4xf32, #tpu.memory_space<vmem>>, %arg5: memref<1x1x18x4xf32, #tpu.memory_space<vmem>>, %arg6: memref<2x2x16x4xf32, #tpu.memory_space<vmem>>, %arg7: memref<1x4xf32, #tpu.memory_space<vmem>>, %arg8: memref<1x2x2x8x16x4xf32, #tpu.memory_space<vmem>>) attributes {dimension_semantics = [#tpu.dimension_semantics<parallel>, #tpu.dimension_semantics<parallel>, #tpu.dimension_semantics<arbitrary>], iteration_bounds = array<i64: 2, 2, 1>, scalar_prefetch = 0 : i64, scratch_operands = 0 : i64, tpu.core_type = #tpu.core_type<tc>, window_params = [{transform_indices = @transform_0, window_bounds = array<i64: 1, 8, 18, 4>}, {transform_indices = @transform_1, window_bounds = array<i64: 1, 1, 18, 4>}, {transform_indices = @transform_2, window_bounds = array<i64: 1, 1, 18, 4>}, {transform_indices = @transform_3, window_bounds = array<i64: 2, 2, 16, 4>}, {transform_indices = @transform_4, window_bounds = array<i64: 1, 4>}, {transform_indices = @transform_5, window_bounds = array<i64: 1, 2, 2, 8, 16, 4>}]} {
    %c0 = arith.constant 0 : index
    %c0_0 = arith.constant 0 : index
    %c0_1 = arith.constant 0 : index
    %c0_2 = arith.constant 0 : index
    %0 = vector.load %arg3[%c0, %c0_0, %c0_1, %c0_2] : memref<1x8x18x4xf32, #tpu.memory_space<vmem>>, vector<1x8x18x4xf32>
    %1 = vector.shape_cast %0 : vector<1x8x18x4xf32> to vector<8x18x4xf32>
    %c0_3 = arith.constant 0 : index
    %c0_4 = arith.constant 0 : index
    %c0_5 = arith.constant 0 : index
    %c0_6 = arith.constant 0 : index
    %2 = vector.load %arg4[%c0_3, %c0_4, %c0_5, %c0_6] : memref<1x1x18x4xf32, #tpu.memory_space<vmem>>, vector<1x1x18x4xf32>
    %3 = vector.shape_cast %2 : vector<1x1x18x4xf32> to vector<1x18x4xf32>
    %c0_7 = arith.constant 0 : index
    %c0_8 = arith.constant 0 : index
    %c0_9 = arith.constant 0 : index
    %c0_10 = arith.constant 0 : index
    %4 = vector.load %arg5[%c0_7, %c0_8, %c0_9, %c0_10] : memref<1x1x18x4xf32, #tpu.memory_space<vmem>>, vector<1x1x18x4xf32>
    %5 = vector.shape_cast %4 : vector<1x1x18x4xf32> to vector<1x18x4xf32>
    %6 = tpu.concatenate %1, %3, %5 in 0 : vector<8x18x4xf32>, vector<1x18x4xf32>, vector<1x18x4xf32> -> vector<10x18x4xf32>
    %c0_11 = arith.constant 0 : index
    %c0_12 = arith.constant 0 : index
    %7 = vector.load %arg7[%c0_11, %c0_12] : memref<1x4xf32, #tpu.memory_space<vmem>>, vector<1x4xf32>
    %8 = vector.extract_strided_slice %6 {offsets = [0, 0, 0], sizes = [8, 16, 4], strides = [1, 1, 1]} : vector<10x18x4xf32> to vector<8x16x4xf32>
    %9 = vector.shape_cast %8 : vector<8x16x4xf32> to vector<128x4xf32>
    %10 = vector.extract_strided_slice %6 {offsets = [0, 1, 0], sizes = [8, 16, 4], strides = [1, 1, 1]} : vector<10x18x4xf32> to vector<8x16x4xf32>
    %11 = vector.shape_cast %10 : vector<8x16x4xf32> to vector<128x4xf32>
    %12 = vector.extract_strided_slice %6 {offsets = [1, 0, 0], sizes = [8, 16, 4], strides = [1, 1, 1]} : vector<10x18x4xf32> to vector<8x16x4xf32>
    %13 = vector.shape_cast %12 : vector<8x16x4xf32> to vector<128x4xf32>
    %14 = vector.extract_strided_slice %6 {offsets = [1, 1, 0], sizes = [8, 16, 4], strides = [1, 1, 1]} : vector<10x18x4xf32> to vector<8x16x4xf32>
    %15 = vector.shape_cast %14 : vector<8x16x4xf32> to vector<128x4xf32>
    %16 = tpu.concatenate %9, %11, %13, %15 in 1 : vector<128x4xf32>, vector<128x4xf32>, vector<128x4xf32>, vector<128x4xf32> -> vector<128x16xf32>
    %c0_13 = arith.constant 0 : index
    %c0_14 = arith.constant 0 : index
    %c0_15 = arith.constant 0 : index
    %c0_16 = arith.constant 0 : index
    %17 = vector.load %arg6[%c0_13, %c0_14, %c0_15, %c0_16] : memref<2x2x16x4xf32, #tpu.memory_space<vmem>>, vector<1x1x16x4xf32>
    %18 = vector.shape_cast %17 : vector<1x1x16x4xf32> to vector<16x4xf32>
    %cst = arith.constant dense<0.000000e+00> : vector<128x4xf32>
    %19 = tpu.matmul %16, %18, %cst {dimension_numbers = #tpu.dot_dimension_numbers<[1], [0], [0], [1], [0, 0, 1, 1], [], []>} : vector<128x16xf32>, vector<16x4xf32>, vector<128x4xf32> -> vector<128x4xf32>
    %20 = vector.broadcast %7 : vector<1x4xf32> to vector<128x4xf32>
    %21 = arith.addf %19, %20 : vector<128x4xf32>
    %22 = vector.shape_cast %21 : vector<128x4xf32> to vector<8x16x4xf32>
    %c0_17 = arith.constant 0 : index
    %c0_18 = arith.constant 0 : index
    %c0_19 = arith.constant 0 : index
    %c0_20 = arith.constant 0 : index
    %c0_21 = arith.constant 0 : index
    %c0_22 = arith.constant 0 : index
    %23 = vector.load %arg8[%c0_17, %c0_18, %c0_19, %c0_20, %c0_21, %c0_22] : memref<1x2x2x8x16x4xf32, #tpu.memory_space<vmem>>, vector<1x1x1x8x16x4xf32>
    %24 = vector.shape_cast %23 : vector<1x1x1x8x16x4xf32> to vector<8x16x4xf32>
    %25 = vector.shape_cast %22 : vector<8x16x4xf32> to vector<1x1x1x8x16x4xf32>
    tpu.vector_store %arg8[%c0_17, %c0_18, %c0_19, %c0_20, %c0_21, %c0_22], %25 {strides = array<i32>} : memref<1x2x2x8x16x4xf32, #tpu.memory_space<vmem>>, vector<1x1x1x8x16x4xf32>,
    %26 = vector.extract_strided_slice %6 {offsets = [0, 1, 0], sizes = [8, 16, 4], strides = [1, 1, 1]} : vector<10x18x4xf32> to vector<8x16x4xf32>
    %27 = vector.shape_cast %26 : vector<8x16x4xf32> to vector<128x4xf32>
    %28 = vector.extract_strided_slice %6 {offsets = [0, 2, 0], sizes = [8, 16, 4], strides = [1, 1, 1]} : vector<10x18x4xf32> to vector<8x16x4xf32>
    %29 = vector.shape_cast %28 : vector<8x16x4xf32> to vector<128x4xf32>
    %30 = vector.extract_strided_slice %6 {offsets = [1, 1, 0], sizes = [8, 16, 4], strides = [1, 1, 1]} : vector<10x18x4xf32> to vector<8x16x4xf32>
    %31 = vector.shape_cast %30 : vector<8x16x4xf32> to vector<128x4xf32>
    %32 = vector.extract_strided_slice %6 {offsets = [1, 2, 0], sizes = [8, 16, 4], strides = [1, 1, 1]} : vector<10x18x4xf32> to vector<8x16x4xf32>
    %33 = vector.shape_cast %32 : vector<8x16x4xf32> to vector<128x4xf32>
    %34 = tpu.concatenate %27, %29, %31, %33 in 1 : vector<128x4xf32>, vector<128x4xf32>, vector<128x4xf32>, vector<128x4xf32> -> vector<128x16xf32>
    %c0_23 = arith.constant 0 : index
    %c1 = arith.constant 1 : index
    %c0_24 = arith.constant 0 : index
    %c0_25 = arith.constant 0 : index
    %35 = vector.load %arg6[%c0_23, %c1, %c0_24, %c0_25] : memref<2x2x16x4xf32, #tpu.memory_space<vmem>>, vector<1x1x16x4xf32>
    %36 = vector.shape_cast %35 : vector<1x1x16x4xf32> to vector<16x4xf32>
    %cst_26 = arith.constant dense<0.000000e+00> : vector<128x4xf32>
    %37 = tpu.matmul %34, %36, %cst_26 {dimension_numbers = #tpu.dot_dimension_numbers<[1], [0], [0], [1], [0, 0, 1, 1], [], []>} : vector<128x16xf32>, vector<16x4xf32>, vector<128x4xf32> -> vector<128x4xf32>
    %38 = vector.broadcast %7 : vector<1x4xf32> to vector<128x4xf32>
    %39 = arith.addf %37, %38 : vector<128x4xf32>
    %40 = vector.shape_cast %39 : vector<128x4xf32> to vector<8x16x4xf32>
    %c0_27 = arith.constant 0 : index
    %c0_28 = arith.constant 0 : index
    %c1_29 = arith.constant 1 : index
    %c0_30 = arith.constant 0 : index
    %c0_31 = arith.constant 0 : index
    %c0_32 = arith.constant 0 : index
    %41 = vector.load %arg8[%c0_27, %c0_28, %c1_29, %c0_30, %c0_31, %c0_32] : memref<1x2x2x8x16x4xf32, #tpu.memory_space<vmem>>, vector<1x1x1x8x16x4xf32>
    %42 = vector.shape_cast %41 : vector<1x1x1x8x16x4xf32> to vector<8x16x4xf32>
    %43 = vector.shape_cast %40 : vector<8x16x4xf32> to vector<1x1x1x8x16x4xf32>
    tpu.vector_store %arg8[%c0_27, %c0_28, %c1_29, %c0_30, %c0_31, %c0_32], %43 {strides = array<i32>} : memref<1x2x2x8x16x4xf32, #tpu.memory_space<vmem>>, vector<1x1x1x8x16x4xf32>,
    %44 = vector.extract_strided_slice %6 {offsets = [1, 0, 0], sizes = [8, 16, 4], strides = [1, 1, 1]} : vector<10x18x4xf32> to vector<8x16x4xf32>
    %45 = vector.shape_cast %44 : vector<8x16x4xf32> to vector<128x4xf32>
    %46 = vector.extract_strided_slice %6 {offsets = [1, 1, 0], sizes = [8, 16, 4], strides = [1, 1, 1]} : vector<10x18x4xf32> to vector<8x16x4xf32>
    %47 = vector.shape_cast %46 : vector<8x16x4xf32> to vector<128x4xf32>
    %48 = vector.extract_strided_slice %6 {offsets = [2, 0, 0], sizes = [8, 16, 4], strides = [1, 1, 1]} : vector<10x18x4xf32> to vector<8x16x4xf32>
    %49 = vector.shape_cast %48 : vector<8x16x4xf32> to vector<128x4xf32>
    %50 = vector.extract_strided_slice %6 {offsets = [2, 1, 0], sizes = [8, 16, 4], strides = [1, 1, 1]} : vector<10x18x4xf32> to vector<8x16x4xf32>
    %51 = vector.shape_cast %50 : vector<8x16x4xf32> to vector<128x4xf32>
    %52 = tpu.concatenate %45, %47, %49, %51 in 1 : vector<128x4xf32>, vector<128x4xf32>, vector<128x4xf32>, vector<128x4xf32> -> vector<128x16xf32>
    %c1_33 = arith.constant 1 : index
    %c0_34 = arith.constant 0 : index
    %c0_35 = arith.constant 0 : index
    %c0_36 = arith.constant 0 : index
    %53 = vector.load %arg6[%c1_33, %c0_34, %c0_35, %c0_36] : memref<2x2x16x4xf32, #tpu.memory_space<vmem>>, vector<1x1x16x4xf32>
    %54 = vector.shape_cast %53 : vector<1x1x16x4xf32> to vector<16x4xf32>
    %cst_37 = arith.constant dense<0.000000e+00> : vector<128x4xf32>
    %55 = tpu.matmul %52, %54, %cst_37 {dimension_numbers = #tpu.dot_dimension_numbers<[1], [0], [0], [1], [0, 0, 1, 1], [], []>} : vector<128x16xf32>, vector<16x4xf32>, vector<128x4xf32> -> vector<128x4xf32>
    %56 = vector.broadcast %7 : vector<1x4xf32> to vector<128x4xf32>
    %57 = arith.addf %55, %56 : vector<128x4xf32>
    %58 = vector.shape_cast %57 : vector<128x4xf32> to vector<8x16x4xf32>
    %c0_38 = arith.constant 0 : index
    %c1_39 = arith.constant 1 : index
    %c0_40 = arith.constant 0 : index
    %c0_41 = arith.constant 0 : index
    %c0_42 = arith.constant 0 : index
    %c0_43 = arith.constant 0 : index
    %59 = vector.load %arg8[%c0_38, %c1_39, %c0_40, %c0_41, %c0_42, %c0_43] : memref<1x2x2x8x16x4xf32, #tpu.memory_space<vmem>>, vector<1x1x1x8x16x4xf32>
    %60 = vector.shape_cast %59 : vector<1x1x1x8x16x4xf32> to vector<8x16x4xf32>
    %61 = vector.shape_cast %58 : vector<8x16x4xf32> to vector<1x1x1x8x16x4xf32>
    tpu.vector_store %arg8[%c0_38, %c1_39, %c0_40, %c0_41, %c0_42, %c0_43], %61 {strides = array<i32>} : memref<1x2x2x8x16x4xf32, #tpu.memory_space<vmem>>, vector<1x1x1x8x16x4xf32>,
    %62 = vector.extract_strided_slice %6 {offsets = [1, 1, 0], sizes = [8, 16, 4], strides = [1, 1, 1]} : vector<10x18x4xf32> to vector<8x16x4xf32>
    %63 = vector.shape_cast %62 : vector<8x16x4xf32> to vector<128x4xf32>
    %64 = vector.extract_strided_slice %6 {offsets = [1, 2, 0], sizes = [8, 16, 4], strides = [1, 1, 1]} : vector<10x18x4xf32> to vector<8x16x4xf32>
    %65 = vector.shape_cast %64 : vector<8x16x4xf32> to vector<128x4xf32>
    %66 = vector.extract_strided_slice %6 {offsets = [2, 1, 0], sizes = [8, 16, 4], strides = [1, 1, 1]} : vector<10x18x4xf32> to vector<8x16x4xf32>
    %67 = vector.shape_cast %66 : vector<8x16x4xf32> to vector<128x4xf32>
    %68 = vector.extract_strided_slice %6 {offsets = [2, 2, 0], sizes = [8, 16, 4], strides = [1, 1, 1]} : vector<10x18x4xf32> to vector<8x16x4xf32>
    %69 = vector.shape_cast %68 : vector<8x16x4xf32> to vector<128x4xf32>
    %70 = tpu.concatenate %63, %65, %67, %69 in 1 : vector<128x4xf32>, vector<128x4xf32>, vector<128x4xf32>, vector<128x4xf32> -> vector<128x16xf32>
    %c1_44 = arith.constant 1 : index
    %c1_45 = arith.constant 1 : index
    %c0_46 = arith.constant 0 : index
    %c0_47 = arith.constant 0 : index
    %71 = vector.load %arg6[%c1_44, %c1_45, %c0_46, %c0_47] : memref<2x2x16x4xf32, #tpu.memory_space<vmem>>, vector<1x1x16x4xf32>
    %72 = vector.shape_cast %71 : vector<1x1x16x4xf32> to vector<16x4xf32>
    %cst_48 = arith.constant dense<0.000000e+00> : vector<128x4xf32>
    %73 = tpu.matmul %70, %72, %cst_48 {dimension_numbers = #tpu.dot_dimension_numbers<[1], [0], [0], [1], [0, 0, 1, 1], [], []>} : vector<128x16xf32>, vector<16x4xf32>, vector<128x4xf32> -> vector<128x4xf32>
    %74 = vector.broadcast %7 : vector<1x4xf32> to vector<128x4xf32>
    %75 = arith.addf %73, %74 : vector<128x4xf32>
    %76 = vector.shape_cast %75 : vector<128x4xf32> to vector<8x16x4xf32>
    %c0_49 = arith.constant 0 : index
    %c1_50 = arith.constant 1 : index
    %c1_51 = arith.constant 1 : index
    %c0_52 = arith.constant 0 : index
    %c0_53 = arith.constant 0 : index
    %c0_54 = arith.constant 0 : index
    %77 = vector.load %arg8[%c0_49, %c1_50, %c1_51, %c0_52, %c0_53, %c0_54] : memref<1x2x2x8x16x4xf32, #tpu.memory_space<vmem>>, vector<1x1x1x8x16x4xf32>
    %78 = vector.shape_cast %77 : vector<1x1x1x8x16x4xf32> to vector<8x16x4xf32>
    %79 = vector.shape_cast %76 : vector<8x16x4xf32> to vector<1x1x1x8x16x4xf32>
    tpu.vector_store %arg8[%c0_49, %c1_50, %c1_51, %c0_52, %c0_53, %c0_54], %79 {strides = array<i32>} : memref<1x2x2x8x16x4xf32, #tpu.memory_space<vmem>>, vector<1x1x1x8x16x4xf32>,
    return
  }
  func.func @transform_0(%arg0: i32, %arg1: i32, %arg2: i32) -> (i32, i32, i32, i32) {
    %c0_i32 = arith.constant 0 : i32
    %c0_i32_0 = arith.constant 0 : i32
    %c0_i32_1 = arith.constant 0 : i32
    return %arg0, %arg1, %c0_i32, %c0_i32_0 : i32, i32, i32, i32
  }
  func.func @transform_1(%arg0: i32, %arg1: i32, %arg2: i32) -> (i32, i32, i32, i32) {
    %c1_i32 = arith.constant 1 : i32
    %0 = arith.addi %arg1, %c1_i32 : i32
    %c8_i32 = arith.constant 8 : i32
    %1 = arith.muli %0, %c8_i32 : i32
    %c0_i32 = arith.constant 0 : i32
    %c0_i32_0 = arith.constant 0 : i32
    %c0_i32_1 = arith.constant 0 : i32
    return %arg0, %1, %c0_i32, %c0_i32_0 : i32, i32, i32, i32
  }
  func.func @transform_2(%arg0: i32, %arg1: i32, %arg2: i32) -> (i32, i32, i32, i32) {
    %c1_i32 = arith.constant 1 : i32
    %0 = arith.addi %arg1, %c1_i32 : i32
    %c8_i32 = arith.constant 8 : i32
    %1 = arith.muli %0, %c8_i32 : i32
    %c1_i32_0 = arith.constant 1 : i32
    %2 = arith.addi %1, %c1_i32_0 : i32
    %c0_i32 = arith.constant 0 : i32
    %c0_i32_1 = arith.constant 0 : i32
    %c0_i32_2 = arith.constant 0 : i32
    return %arg0, %2, %c0_i32, %c0_i32_1 : i32, i32, i32, i32
  }
  func.func @transform_3(%arg0: i32, %arg1: i32, %arg2: i32) -> (i32, i32, i32, i32) {
    %c0_i32 = arith.constant 0 : i32
    %c0_i32_0 = arith.constant 0 : i32
    %c0_i32_1 = arith.constant 0 : i32
    %c0_i32_2 = arith.constant 0 : i32
    return %c0_i32, %c0_i32_0, %c0_i32_1, %arg2 : i32, i32, i32, i32
  }
  func.func @transform_4(%arg0: i32, %arg1: i32, %arg2: i32) -> (i32, i32) {
    %c0_i32 = arith.constant 0 : i32
    %c0_i32_0 = arith.constant 0 : i32
    return %c0_i32, %arg2 : i32, i32
  }
  func.func @transform_5(%arg0: i32, %arg1: i32, %arg2: i32) -> (i32, i32, i32, i32, i32, i32) {
    %c0_i32 = arith.constant 0 : i32
    %c0_i32_0 = arith.constant 0 : i32
    %c0_i32_1 = arith.constant 0 : i32
    %c0_i32_2 = arith.constant 0 : i32
    return %arg0, %c0_i32, %c0_i32_0, %arg1, %c0_i32_1, %arg2 : i32, i32, i32, i32, i32, i32
  }
}

</mosaic_0001>

<llo_original>
// kernel: upsample_forward.1
$region0: #{upsample_forward.1}
  #allocation0 [shape = 'u32[]', space=smem, size = 0x4, offset = 0x4, fixed_abs, tag = 'smem constant byte address 0x4 - core index']
  #allocation1 [shape = 'u32[144,128]{1,0:T(1,128)}', space=vmem, size = 0x12000, scoped, tag = 'internal scratch']
  %s0 = inlined_call_operand.vmem [shape: f32[2,18,18,4], index: 0, kind: input, shape index: {}, may-alias: {0,1,2}]
  %s1 = inlined_call_operand.vmem [shape: f32[2,18,18,4], index: 1, kind: input, shape index: {}, may-alias: {0,1,2}]
  %s2 = inlined_call_operand.vmem [shape: f32[2,18,18,4], index: 2, kind: input, shape index: {}, may-alias: {0,1,2}]
  %s3 = inlined_call_operand.vmem [shape: f32[2,2,16,4], index: 3, kind: input, shape index: {}]
  %s4 = inlined_call_operand.vmem [shape: f32[1,4], index: 4, kind: input, shape index: {}]
  %s5 = inlined_call_operand.vmem [shape: f32[2,2,2,16,16,4], index: 5, kind: output, shape index: {}]
  %s6 = sld [smem:[#allocation0]]
  $region87: #{upsample_forward.1} parent=0
    _
  %s8 = ssub.s32 1, %s6
  %s9 = scalar_select 0, %s8, %s6
  $region1: #{upsample_forward.1} parent=0
    #allocation2 [shape = 'u8[524288]{0}', space=vmem, size = 0x80000, scoped, tag = 'output window, operand 0']
    loop: start=0, step=1, limit=6
    $region2: #{upsample_forward.1} parent=1 // loop_pre_header
      _
    $region3: #{upsample_forward.1} parent=1 // loop_header
      %s11 = sphi 0, %s15
      %p12 = scmp.ge.s32.totalorder %s11, 6
      %s18 = sphi 0, %s37
      %s19 = sphi 0, %s33
      %s20 = sphi 0, %s29
      %s21 = sphi 0, %s18
      %s22 = sphi 0, %s19
      %s23 = sphi 0, %s20
      %s24 = sphi 0, %s21
      %s25 = sphi 0, %s22
      %s26 = sphi 0, %s23
      %s42 = sphi 0, %s44
      %s45 = sphi 0, %s42
      %s46 = sphi 0, %s45
      %s62 = sphi 0, %s46
      %s74 = sphi 0, %s76
      %s77 = sphi 0, %s74
      %s78 = sphi 0, %s77
      %s94 = sphi 0, %s78
      %s108 = sphi 0, %s110
      %s111 = sphi 0, %s108
      %s112 = sphi 0, %s111
      %s128 = sphi 0, %s112
      %s134 = sphi 0, %s136
      %s137 = sphi 0, %s134
      %s138 = sphi 0, %s137
      %s154 = sphi 0, %s138
      %s160 = sphi 0, %s162
      %s163 = sphi 0, %s160
      %s164 = sphi 0, %s163
      %s180 = sphi 0, %s164
      %s190 = sphi 0, %s192
      %s193 = sphi 0, %s190
      %s194 = sphi 0, %s193
      %s210 = sphi 0, %s194
    $region4: #{upsample_forward.1} parent=1 // loop_header_branch
      %14 = sbr.rel (%p12) target = $region8
    $region5: #{upsample_forward.1} parent=1 // loop_body
      %s16 = ssub.s32 %s11, 1
      %s17 = ssub.s32 %s11, 2
      %s27 = sadd.s32 1, %s20
      %p28 = scmp.ge.s32.totalorder %s27, 1
      %s29 = scalar_select %p28, 0, %s27
      %s30 = sadd.s32 1, %s19
      %s31 = scalar_select %p28, %s30, %s19
      %p32 = scmp.ge.s32.totalorder %s31, 2
      %s33 = scalar_select %p32, 0, %s31
      %s34 = sadd.s32 1, %s18
      %s35 = scalar_select %p32, %s34, %s18
      %p36 = scmp.ge.s32.totalorder %s35, 2
      %s37 = scalar_select %p36, 0, %s35
      %s38 = ssub.s32 %s18, %s37
      %s39 = ssub.s32 %s19, %s33
      %s40 = sor.u32 %s38, %s39
      %p41 = scmp.eq.s32.totalorder %s40, 0
      %s43 = sadd.s32 %s42, 1
      %s44 = scalar_select %p41, %s42, %s43
      %p47 = pneg %p41
      %p48 = scmp.eq.s32.totalorder %s11, 3
      %p49 = por %p47, %p48
      %p50 = scmp.ne.s32.totalorder %s42, %s45
      %p51 = scmp.eq.s32.totalorder %s11, 0
      %p52 = por %p50, %p51
      %p53 = scmp.ne.s32.totalorder %s42, %s45
      %p54 = scmp.eq.s32.totalorder %s16, 3
      %p55 = por %p53, %p54
      %p56 = scmp.ne.s32.totalorder %s45, %s46
      %p57 = scmp.eq.s32.totalorder %s16, 0
      %p58 = por %p56, %p57
      %p59 = scmp.ne.s32.totalorder %s45, %s46
      %p60 = scmp.eq.s32.totalorder %s17, 3
      %p61 = por %p59, %p60
      %p63 = scmp.ne.s32.totalorder %s46, %s62
      %p64 = scmp.eq.s32.totalorder %s17, 0
      %p65 = por %p63, %p64
      %s66 = sadd.s32 %s19, 1
      %s67 = smul.u32 %s66, 8
      %s68 = sadd.s32 %s33, 1
      %s69 = smul.u32 %s68, 8
      %s70 = ssub.s32 %s18, %s37
      %s71 = ssub.s32 %s67, %s69
      %s72 = sor.u32 %s70, %s71
      %p73 = scmp.eq.s32.totalorder %s72, 0
      %s75 = sadd.s32 %s74, 1
      %s76 = scalar_select %p73, %s74, %s75
      %p79 = pneg %p73
      %p80 = scmp.eq.s32.totalorder %s11, 3
      %p81 = por %p79, %p80
      %p82 = scmp.ne.s32.totalorder %s74, %s77
      %p83 = scmp.eq.s32.totalorder %s11, 0
      %p84 = por %p82, %p83
      %p85 = scmp.ne.s32.totalorder %s74, %s77
      %p86 = scmp.eq.s32.totalorder %s16, 3
      %p87 = por %p85, %p86
      %p88 = scmp.ne.s32.totalorder %s77, %s78
      %p89 = scmp.eq.s32.totalorder %s16, 0
      %p90 = por %p88, %p89
      %p91 = scmp.ne.s32.totalorder %s77, %s78
      %p92 = scmp.eq.s32.totalorder %s17, 3
      %p93 = por %p91, %p92
      %p95 = scmp.ne.s32.totalorder %s78, %s94
      %p96 = scmp.eq.s32.totalorder %s17, 0
      %p97 = por %p95, %p96
      %s98 = sadd.s32 %s19, 1
      %s99 = smul.u32 %s98, 8
      %s100 = sadd.s32 %s99, 1
      %s101 = sadd.s32 %s33, 1
      %s102 = smul.u32 %s101, 8
      %s103 = sadd.s32 %s102, 1
      %s104 = ssub.s32 %s18, %s37
      %s105 = ssub.s32 %s100, %s103
      %s106 = sor.u32 %s104, %s105
      %p107 = scmp.eq.s32.totalorder %s106, 0
      %s109 = sadd.s32 %s108, 1
      %s110 = scalar_select %p107, %s108, %s109
      %p113 = pneg %p107
      %p114 = scmp.eq.s32.totalorder %s11, 3
      %p115 = por %p113, %p114
      %p116 = scmp.ne.s32.totalorder %s108, %s111
      %p117 = scmp.eq.s32.totalorder %s11, 0
      %p118 = por %p116, %p117
      %p119 = scmp.ne.s32.totalorder %s108, %s111
      %p120 = scmp.eq.s32.totalorder %s16, 3
      %p121 = por %p119, %p120
      %p122 = scmp.ne.s32.totalorder %s111, %s112
      %p123 = scmp.eq.s32.totalorder %s16, 0
      %p124 = por %p122, %p123
      %p125 = scmp.ne.s32.totalorder %s111, %s112
      %p126 = scmp.eq.s32.totalorder %s17, 3
      %p127 = por %p125, %p126
      %p129 = scmp.ne.s32.totalorder %s112, %s128
      %p130 = scmp.eq.s32.totalorder %s17, 0
      %p131 = por %p129, %p130
      %s132 = ssub.s32 %s20, %s29
      %p133 = scmp.eq.s32.totalorder %s132, 0
      %s135 = sadd.s32 %s134, 1
      %s136 = scalar_select %p133, %s134, %s135
      %p139 = pneg %p133
      %p140 = scmp.eq.s32.totalorder %s11, 3
      %p141 = por %p139, %p140
      %p142 = scmp.ne.s32.totalorder %s134, %s137
      %p143 = scmp.eq.s32.totalorder %s11, 0
      %p144 = por %p142, %p143
      %p145 = scmp.ne.s32.totalorder %s134, %s137
      %p146 = scmp.eq.s32.totalorder %s16, 3
      %p147 = por %p145, %p146
      %p148 = scmp.ne.s32.totalorder %s137, %s138
      %p149 = scmp.eq.s32.totalorder %s16, 0
      %p150 = por %p148, %p149
      %p151 = scmp.ne.s32.totalorder %s137, %s138
      %p152 = scmp.eq.s32.totalorder %s17, 3
      %p153 = por %p151, %p152
      %p155 = scmp.ne.s32.totalorder %s138, %s154
      %p156 = scmp.eq.s32.totalorder %s17, 0
      %p157 = por %p155, %p156
      %s158 = ssub.s32 %s20, %s29
      %p159 = scmp.eq.s32.totalorder %s158, 0
      %s161 = sadd.s32 %s160, 1
      %s162 = scalar_select %p159, %s160, %s161
      %p165 = pneg %p159
      %p166 = scmp.eq.s32.totalorder %s11, 3
      %p167 = por %p165, %p166
      %p168 = scmp.ne.s32.totalorder %s160, %s163
      %p169 = scmp.eq.s32.totalorder %s11, 0
      %p170 = por %p168, %p169
      %p171 = scmp.ne.s32.totalorder %s160, %s163
      %p172 = scmp.eq.s32.totalorder %s16, 3
      %p173 = por %p171, %p172
      %p174 = scmp.ne.s32.totalorder %s163, %s164
      %p175 = scmp.eq.s32.totalorder %s16, 0
      %p176 = por %p174, %p175
      %p177 = scmp.ne.s32.totalorder %s163, %s164
      %p178 = scmp.eq.s32.totalorder %s17, 3
      %p179 = por %p177, %p178
      %p181 = scmp.ne.s32.totalorder %s164, %s180
      %p182 = scmp.eq.s32.totalorder %s17, 0
      %p183 = por %p181, %p182
      %s184 = ssub.s32 %s18, %s37
      %s185 = ssub.s32 %s19, %s33
      %s186 = sor.u32 %s184, %s185
      %s187 = ssub.s32 %s20, %s29
      %s188 = sor.u32 %s186, %s187
      %p189 = scmp.eq.s32.totalorder %s188, 0
      %s191 = sadd.s32 %s190, 1
      %s192 = scalar_select %p189, %s190, %s191
      %p195 = pneg %p189
      %p196 = scmp.eq.s32.totalorder %s11, 3
      %p197 = por %p195, %p196
      %p198 = scmp.ne.s32.totalorder %s190, %s193
      %p199 = scmp.eq.s32.totalorder %s11, 0
      %p200 = por %p198, %p199
      %p201 = scmp.ne.s32.totalorder %s190, %s193
      %p202 = scmp.eq.s32.totalorder %s16, 3
      %p203 = por %p201, %p202
      %p204 = scmp.ne.s32.totalorder %s193, %s194
      %p205 = scmp.eq.s32.totalorder %s16, 0
      %p206 = por %p204, %p205
      %p207 = scmp.ne.s32.totalorder %s193, %s194
      %p208 = scmp.eq.s32.totalorder %s17, 3
      %p209 = por %p207, %p208
      %p211 = scmp.ne.s32.totalorder %s194, %s210
      %p212 = scmp.eq.s32.totalorder %s17, 0
      %p213 = por %p211, %p212
      %p214 = scmp.le.s32.totalorder 1, %s11
      %p215 = scmp.lt.s32.totalorder %s11, 5
      %p216 = pnand %p214, %p215
      %p217 = pneg %p216
      // Predicated region
      $region9: #{upsample_forward.1} parent=5 // pred_check
        _
      $region10: #{upsample_forward.1} parent=5 // pred_check_branch
        %219 = sbr.rel (%p216) target = $region12
      $region11: #{upsample_forward.1} parent=5 // pred_region
        %s220 = ssub.s32 %s11, 1
        // Predicated region
        $region13: #{upsample_forward.1} parent=11 // pred_check
          %p221 = pneg %p150
        $region14: #{upsample_forward.1} parent=11 // pred_check_branch
          %223 = sbr.rel (%p221) target = $region16
        $region15: #{upsample_forward.1} parent=11 // pred_region
          %p224 = scmp.lt.s32.totalorder %s23, 0
          %s225 = scalar_select %p224, %s23, 0
          %s226 = smul.addr %s225, 8
          %s227 = scalar_lea.vmem %s3, %s226
        $region16: #{upsample_forward.1} parent=11 // pred_fallthru
          _
        // Predicated region
        $region17: #{upsample_forward.1} parent=11 // pred_check
          %p228 = pneg %p176
        $region18: #{upsample_forward.1} parent=11 // pred_check_branch
          %230 = sbr.rel (%p228) target = $region20
        $region19: #{upsample_forward.1} parent=11 // pred_region
          %p231 = scmp.lt.s32.totalorder %s23, 0
          %s232 = scalar_select %p231, %s23, 0
          %s233 = scalar_lea.vmem %s4, %s232
        $region20: #{upsample_forward.1} parent=11 // pred_fallthru
          _
      $region12: #{upsample_forward.1} parent=5 // pred_fallthru
        _
      %p234 = scmp.lt.s32.totalorder %s11, 4
      // Predicated region
      $region21: #{upsample_forward.1} parent=5 // pred_check
        %p235 = pneg %p234
      $region22: #{upsample_forward.1} parent=5 // pred_check_branch
        %237 = sbr.rel (%p235) target = $region24
      $region23: #{upsample_forward.1} parent=5 // pred_region
        // Predicated region
        $region25: #{upsample_forward.1} parent=23 // pred_check
          %p238 = pneg %p52
        $region26: #{upsample_forward.1} parent=23 // pred_check_branch
          %240 = sbr.rel (%p238) target = $region28
        $region27: #{upsample_forward.1} parent=23 // pred_region
          %s241 = smul.u32 8, %s19
          %s242 = ssub.s32 18, %s241
          %p243 = scmp.lt.s32.totalorder %s242, 8
          %s244 = scalar_select %p243, %s242, 8
          %s245 = smul.u32 128, %s244
          %s246 = smul.u32 %s245, 3
          %p247 = scmp.lt.s32.totalorder %s18, 1
          %s248 = scalar_select %p247, %s18, 1
          %p249 = scmp.lt.s32.totalorder %s241, 17
          %s250 = scalar_select %p249, %s241, 17
          %s251 = smul.addr %s250, 3
          %s252 = smul.addr %s248, 54
          %s253 = sadd.s32 %s251, %s252
          %s254 = smul.addr %s253, 8
          %s255 = scalar_lea.vmem %s0, %s254
          %s256 = smul.u32 8, %s19
          %s257 = ssub.s32 18, %s256
          %p258 = scmp.lt.s32.totalorder %s257, 8
          %s259 = scalar_select %p258, %s257, 8
          %s260 = smul.u32 128, %s259
          %s261 = smul.u32 %s260, 3
        $region28: #{upsample_forward.1} parent=23 // pred_fallthru
          _
        // Predicated region
        $region29: #{upsample_forward.1} parent=23 // pred_check
          %p262 = pneg %p84
        $region30: #{upsample_forward.1} parent=23 // pred_check_branch
          %264 = sbr.rel (%p262) target = $region32
        $region31: #{upsample_forward.1} parent=23 // pred_region
          %s265 = sadd.s32 %s19, 1
          %s266 = smul.u32 %s265, 8
          %p267 = scmp.lt.s32.totalorder %s18, 1
          %s268 = scalar_select %p267, %s18, 1
          %p269 = scmp.lt.s32.totalorder %s266, 17
          %s270 = scalar_select %p269, %s266, 17
          %s271 = smul.addr %s270, 3
          %s272 = smul.addr %s268, 54
          %s273 = sadd.s32 %s271, %s272
          %s274 = smul.addr %s273, 8
          %s275 = scalar_lea.vmem %s1, %s274
          %s276 = sadd.s32 %s19, 1
          %s277 = smul.u32 %s276, 8
        $region32: #{upsample_forward.1} parent=23 // pred_fallthru
          _
        // Predicated region
        $region33: #{upsample_forward.1} parent=23 // pred_check
          %p278 = pneg %p118
        $region34: #{upsample_forward.1} parent=23 // pred_check_branch
          %280 = sbr.rel (%p278) target = $region36
        $region35: #{upsample_forward.1} parent=23 // pred_region
          %s281 = sadd.s32 %s19, 1
          %s282 = smul.u32 %s281, 8
          %s283 = sadd.s32 %s282, 1
          %p284 = scmp.lt.s32.totalorder %s18, 1
          %s285 = scalar_select %p284, %s18, 1
          %p286 = scmp.lt.s32.totalorder %s283, 17
          %s287 = scalar_select %p286, %s283, 17
          %s288 = smul.addr %s287, 3
          %s289 = smul.addr %s285, 54
          %s290 = sadd.s32 %s288, %s289
          %s291 = smul.addr %s290, 8
          %s292 = scalar_lea.vmem %s2, %s291
          %s293 = sadd.s32 %s19, 1
          %s294 = smul.u32 %s293, 8
          %s295 = sadd.s32 %s294, 1
        $region36: #{upsample_forward.1} parent=23 // pred_fallthru
          _
      $region24: #{upsample_forward.1} parent=5 // pred_fallthru
        _
      %p296 = scmp.le.s32.totalorder 1, %s11
      %p297 = scmp.lt.s32.totalorder %s11, 5
      %p298 = pnand %p296, %p297
      %p299 = pneg %p298
      // Predicated region
      $region37: #{upsample_forward.1} parent=5 // pred_check
        _
      $region38: #{upsample_forward.1} parent=5 // pred_check_branch
        %301 = sbr.rel (%p298) target = $region40
      $region39: #{upsample_forward.1} parent=5 // pred_region
        %s302 = ssub.s32 %s11, 1
        %s303 = smul.u32 8, %s22
        %s304 = ssub.s32 18, %s303
        %p305 = scmp.lt.s32.totalorder %s304, 8
        %s306 = scalar_select %p305, %s304, 8
        %s307 = smul.u32 128, %s306
        %s308 = smul.u32 %s307, 3
        %p309 = scmp.lt.s32.totalorder %s21, 1
        %s310 = scalar_select %p309, %s21, 1
        %p311 = scmp.lt.s32.totalorder %s303, 17
        %s312 = scalar_select %p311, %s303, 17
        %s313 = smul.addr %s312, 3
        %s314 = smul.addr %s310, 54
        %s315 = sadd.s32 %s313, %s314
        %s316 = smul.addr %s315, 8
        %s317 = scalar_lea.vmem %s0, %s316
        %p318 = pneg %p58
        %p319 = pneg %p55
        %s320 = sadd.s32 %s22, 1
        %s321 = smul.u32 %s320, 8
        %p322 = scmp.lt.s32.totalorder %s21, 1
        %s323 = scalar_select %p322, %s21, 1
        %p324 = scmp.lt.s32.totalorder %s321, 17
        %s325 = scalar_select %p324, %s321, 17
        %s326 = smul.addr %s325, 3
        %s327 = smul.addr %s323, 54
        %s328 = sadd.s32 %s326, %s327
        %s329 = smul.addr %s328, 8
        %s330 = scalar_lea.vmem %s1, %s329
        %p331 = pneg %p90
        %p332 = pneg %p87
        %s333 = sadd.s32 %s22, 1
        %s334 = smul.u32 %s333, 8
        %s335 = sadd.s32 %s334, 1
        %p336 = scmp.lt.s32.totalorder %s21, 1
        %s337 = scalar_select %p336, %s21, 1
        %p338 = scmp.lt.s32.totalorder %s335, 17
        %s339 = scalar_select %p338, %s335, 17
        %s340 = smul.addr %s339, 3
        %s341 = smul.addr %s337, 54
        %s342 = sadd.s32 %s340, %s341
        %s343 = smul.addr %s342, 8
        %s344 = scalar_lea.vmem %s2, %s343
        %p345 = pneg %p124
        %p346 = pneg %p121
        %p347 = scmp.lt.s32.totalorder %s23, 0
        %s348 = scalar_select %p347, %s23, 0
        %s349 = smul.addr %s348, 8
        %s350 = scalar_lea.vmem %s3, %s349
        %p351 = pneg %p150
        %p352 = pneg %p147
        %p353 = scmp.lt.s32.totalorder %s23, 0
        %s354 = scalar_select %p353, %s23, 0
        %s355 = scalar_lea.vmem %s4, %s354
        %p356 = pneg %p176
        %p357 = pneg %p173
        %p358 = pneg %p206
        %p359 = pneg %p203
        %s360 = sand.u32 %s193, 1
        %s361 = sand.u32 %s193, 1
        %s362 = smul.addr %s361, 512
        %s363 = scalar_lea.vmem [#allocation2], %s362
        %s364 = smul.u32 8, %s22
        %s365 = ssub.s32 18, %s364
        %p366 = scmp.lt.s32.totalorder %s365, 8
        %s367 = scalar_select %p366, %s365, 8
        %s368 = smul.u32 128, %s367
        %s369 = smul.u32 %s368, 3
        %p370 = scmp.lt.s32.totalorder %s21, 1
        %s371 = scalar_select %p370, %s21, 1
        %p372 = scmp.lt.s32.totalorder %s364, 17
        %s373 = scalar_select %p372, %s364, 17
        %s374 = smul.addr %s373, 3
        %s375 = smul.addr %s371, 54
        %s376 = sadd.s32 %s374, %s375
        %s377 = smul.addr %s376, 8
        %s378 = scalar_lea.vmem %s0, %s377
        %s379 = smul.u32 8, %s22
        %s380 = ssub.s32 18, %s379
        %p381 = scmp.lt.s32.totalorder %s380, 8
        %s382 = scalar_select %p381, %s380, 8
        %s383 = smul.u32 128, %s382
        %s384 = smul.u32 %s383, 3
        %s385 = sadd.s32 %s22, 1
        %s386 = smul.u32 %s385, 8
        %p387 = scmp.lt.s32.totalorder %s21, 1
        %s388 = scalar_select %p387, %s21, 1
        %p389 = scmp.lt.s32.totalorder %s386, 17
        %s390 = scalar_select %p389, %s386, 17
        %s391 = smul.addr %s390, 3
        %s392 = smul.addr %s388, 54
        %s393 = sadd.s32 %s391, %s392
        %s394 = smul.addr %s393, 8
        %s395 = scalar_lea.vmem %s1, %s394
        %s396 = sadd.s32 %s22, 1
        %s397 = smul.u32 %s396, 8
        %s398 = sadd.s32 %s22, 1
        %s399 = smul.u32 %s398, 8
        %s400 = sadd.s32 %s399, 1
        %p401 = scmp.lt.s32.totalorder %s21, 1
        %s402 = scalar_select %p401, %s21, 1
        %p403 = scmp.lt.s32.totalorder %s400, 17
        %s404 = scalar_select %p403, %s400, 17
        %s405 = smul.addr %s404, 3
        %s406 = smul.addr %s402, 54
        %s407 = sadd.s32 %s405, %s406
        %s408 = smul.addr %s407, 8
        %s409 = scalar_lea.vmem %s2, %s408
        %s410 = sadd.s32 %s22, 1
        %s411 = smul.u32 %s410, 8
        %s412 = sadd.s32 %s411, 1
        %p413 = scmp.lt.s32.totalorder %s23, 0
        %s414 = scalar_select %p413, %s23, 0
        %s415 = smul.addr %s414, 8
        %s416 = scalar_lea.vmem %s3, %s415
        %p417 = scmp.lt.s32.totalorder %s23, 0
        %s418 = scalar_select %p417, %s23, 0
        %s419 = scalar_lea.vmem %s4, %s418
        %s420 = smul.u32 8, %s22
        %v421 = vld [vmem:[%s378] sm:$0xff]
        %v422 = vld [vmem:[%s378 + $0x8] sm:$0xff]
        %v423 = vld [vmem:[%s378 + $0x10] sm:$0x3]
        %v424 = vld [vmem:[%s378 + $0x18] sm:$0xff]
        %v425 = vld [vmem:[%s378 + $0x20] sm:$0xff]
        %v426 = vld [vmem:[%s378 + $0x28] sm:$0x3]
        %v427 = vld [vmem:[%s378 + $0x30] sm:$0xff]
        %v428 = vld [vmem:[%s378 + $0x38] sm:$0xff]
        %v429 = vld [vmem:[%s378 + $0x40] sm:$0x3]
        %v430 = vld [vmem:[%s378 + $0x48] sm:$0xff]
        %v431 = vld [vmem:[%s378 + $0x50] sm:$0xff]
        %v432 = vld [vmem:[%s378 + $0x58] sm:$0x3]
        %v433 = vld [vmem:[%s378 + $0x60] sm:$0xff]
        %v434 = vld [vmem:[%s378 + $0x68] sm:$0xff]
        %v435 = vld [vmem:[%s378 + $0x70] sm:$0x3]
        %v436 = vld [vmem:[%s378 + $0x78] sm:$0xff]
        %v437 = vld [vmem:[%s378 + $0x80] sm:$0xff]
        %v438 = vld [vmem:[%s378 + $0x88] sm:$0x3]
        %v439 = vld [vmem:[%s378 + $0x90] sm:$0xff]
        %v440 = vld [vmem:[%s378 + $0x98] sm:$0xff]
        %v441 = vld [vmem:[%s378 + $0xa0] sm:$0x3]
        %v442 = vld [vmem:[%s378 + $0xa8] sm:$0xff]
        %v443 = vld [vmem:[%s378 + $0xb0] sm:$0xff]
        %v444 = vld [vmem:[%s378 + $0xb8] sm:$0x3]
        %v445 = vld [vmem:[%s395] sm:$0xff]
        %v446 = vld [vmem:[%s395 + $0x8] sm:$0xff]
        %v447 = vld [vmem:[%s395 + $0x10] sm:$0x3]
        %v448 = vld [vmem:[%s409] sm:$0xff]
        %v449 = vld [vmem:[%s409 + $0x8] sm:$0xff]
        %v450 = vld [vmem:[%s409 + $0x10] sm:$0x3]
        %v451 = vld [vmem:[%s419] sm:$0x1]
        %vm476 = vcmask 1046528
        %v477 = vrot.slane %v421, 1
        %v478 = vrot.slane %v422, 1
        %v479 = vsel %vm476, %v477, %v478
        %v480 = vrot.slane %v423, 1
        %v481 = vsel %vm476, %v478, %v480
        %v482 = vrot.slane %v424, 1
        %v483 = vrot.slane %v425, 1
        %v484 = vsel %vm476, %v482, %v483
        %v485 = vrot.slane %v426, 1
        %v486 = vsel %vm476, %v483, %v485
        %v487 = vrot.slane %v427, 1
        %v488 = vrot.slane %v428, 1
        %v489 = vsel %vm476, %v487, %v488
        %v490 = vrot.slane %v429, 1
        %v491 = vsel %vm476, %v488, %v490
        %v492 = vrot.slane %v430, 1
        %v493 = vrot.slane %v431, 1
        %v494 = vsel %vm476, %v492, %v493
        %v495 = vrot.slane %v432, 1
        %v496 = vsel %vm476, %v493, %v495
        %v497 = vrot.slane %v433, 1
        %v498 = vrot.slane %v434, 1
        %v499 = vsel %vm476, %v497, %v498
        %v500 = vrot.slane %v435, 1
        %v501 = vsel %vm476, %v498, %v500
        %v502 = vrot.slane %v436, 1
        %v503 = vrot.slane %v437, 1
        %v504 = vsel %vm476, %v502, %v503
        %v505 = vrot.slane %v438, 1
        %v506 = vsel %vm476, %v503, %v505
        %v507 = vrot.slane %v439, 1
        %v508 = vrot.slane %v440, 1
        %v509 = vsel %vm476, %v507, %v508
        %v510 = vrot.slane %v441, 1
        %v511 = vsel %vm476, %v508, %v510
        %v512 = vrot.slane %v442, 1
        %v513 = vrot.slane %v443, 1
        %v514 = vsel %vm476, %v512, %v513
        %v515 = vrot.slane %v444, 1
        %v516 = vsel %vm476, %v513, %v515
        %v536 = vrot.slane %v445, 1
        %v537 = vrot.slane %v446, 1
        %v538 = vsel %vm476, %v536, %v537
        %v539 = vrot.slane %v447, 1
        %v540 = vsel %vm476, %v537, %v539
        %543 = vrot.lane.b32.xlu0 %v479, 4
        %v544 = vpop.permute.xlu0 %543
        %545 = vrot.lane.b32.xlu0 %v481, 4
        %v546 = vpop.permute.xlu0 %545
        %547 = vrot.lane.b32.xlu0 %v484, 4
        %v548 = vpop.permute.xlu0 %547
        %549 = vrot.lane.b32.xlu0 %v486, 4
        %v550 = vpop.permute.xlu0 %549
        %551 = vrot.lane.b32.xlu0 %v489, 4
        %v552 = vpop.permute.xlu0 %551
        %553 = vrot.lane.b32.xlu0 %v491, 4
        %v554 = vpop.permute.xlu0 %553
        %555 = vrot.lane.b32.xlu0 %v494, 4
        %v556 = vpop.permute.xlu0 %555
        %557 = vrot.lane.b32.xlu0 %v496, 4
        %v558 = vpop.permute.xlu0 %557
        %559 = vrot.lane.b32.xlu0 %v499, 4
        %v560 = vpop.permute.xlu0 %559
        %561 = vrot.lane.b32.xlu0 %v501, 4
        %v562 = vpop.permute.xlu0 %561
        %563 = vrot.lane.b32.xlu0 %v504, 4
        %v564 = vpop.permute.xlu0 %563
        %565 = vrot.lane.b32.xlu0 %v506, 4
        %v566 = vpop.permute.xlu0 %565
        %567 = vrot.lane.b32.xlu0 %v509, 4
        %v568 = vpop.permute.xlu0 %567
        %569 = vrot.lane.b32.xlu0 %v511, 4
        %v570 = vpop.permute.xlu0 %569
        %571 = vrot.lane.b32.xlu0 %v514, 4
        %v572 = vpop.permute.xlu0 %571
        %573 = vrot.lane.b32.xlu0 %v516, 4
        %v574 = vpop.permute.xlu0 %573
        %591 = vrot.lane.b32.xlu0 %v424, 8
        %v592 = vpop.permute.xlu0 %591
        %593 = vrot.lane.b32.xlu0 %v425, 8
        %v594 = vpop.permute.xlu0 %593
        %595 = vrot.lane.b32.xlu0 %v427, 8
        %v596 = vpop.permute.xlu0 %595
        %597 = vrot.lane.b32.xlu0 %v428, 8
        %v598 = vpop.permute.xlu0 %597
        %599 = vrot.lane.b32.xlu0 %v430, 8
        %v600 = vpop.permute.xlu0 %599
        %601 = vrot.lane.b32.xlu0 %v431, 8
        %v602 = vpop.permute.xlu0 %601
        %603 = vrot.lane.b32.xlu0 %v433, 8
        %v604 = vpop.permute.xlu0 %603
        %605 = vrot.lane.b32.xlu0 %v434, 8
        %v606 = vpop.permute.xlu0 %605
        %607 = vrot.lane.b32.xlu0 %v436, 8
        %v608 = vpop.permute.xlu0 %607
        %609 = vrot.lane.b32.xlu0 %v437, 8
        %v610 = vpop.permute.xlu0 %609
        %611 = vrot.lane.b32.xlu0 %v439, 8
        %v612 = vpop.permute.xlu0 %611
        %613 = vrot.lane.b32.xlu0 %v440, 8
        %v614 = vpop.permute.xlu0 %613
        %615 = vrot.lane.b32.xlu0 %v442, 8
        %v616 = vpop.permute.xlu0 %615
        %617 = vrot.lane.b32.xlu0 %v443, 8
        %v618 = vpop.permute.xlu0 %617
        %619 = vrot.lane.b32.xlu0 %v445, 8
        %v620 = vpop.permute.xlu0 %619
        %621 = vrot.lane.b32.xlu0 %v446, 8
        %v622 = vpop.permute.xlu0 %621
        %639 = vrot.lane.b32.xlu0 %v484, 12
        %v640 = vpop.permute.xlu0 %639
        %641 = vrot.lane.b32.xlu0 %v486, 12
        %v642 = vpop.permute.xlu0 %641
        %643 = vrot.lane.b32.xlu0 %v489, 12
        %v644 = vpop.permute.xlu0 %643
        %645 = vrot.lane.b32.xlu0 %v491, 12
        %v646 = vpop.permute.xlu0 %645
        %647 = vrot.lane.b32.xlu0 %v494, 12
        %v648 = vpop.permute.xlu0 %647
        %649 = vrot.lane.b32.xlu0 %v496, 12
        %v650 = vpop.permute.xlu0 %649
        %651 = vrot.lane.b32.xlu0 %v499, 12
        %v652 = vpop.permute.xlu0 %651
        %653 = vrot.lane.b32.xlu0 %v501, 12
        %v654 = vpop.permute.xlu0 %653
        %655 = vrot.lane.b32.xlu0 %v504, 12
        %v656 = vpop.permute.xlu0 %655
        %657 = vrot.lane.b32.xlu0 %v506, 12
        %v658 = vpop.permute.xlu0 %657
        %659 = vrot.lane.b32.xlu0 %v509, 12
        %v660 = vpop.permute.xlu0 %659
        %661 = vrot.lane.b32.xlu0 %v511, 12
        %v662 = vpop.permute.xlu0 %661
        %663 = vrot.lane.b32.xlu0 %v514, 12
        %v664 = vpop.permute.xlu0 %663
        %665 = vrot.lane.b32.xlu0 %v516, 12
        %v666 = vpop.permute.xlu0 %665
        %667 = vrot.lane.b32.xlu0 %v538, 12
        %v668 = vpop.permute.xlu0 %667
        %669 = vrot.lane.b32.xlu0 %v540, 12
        %v670 = vpop.permute.xlu0 %669
        %vm687 = vcmask 31744
        %v688 = vsel %vm687, %v421, %v544
        %v689 = vsel %vm687, %v422, %v546
        %v690 = vsel %vm687, %v424, %v548
        %v691 = vsel %vm687, %v425, %v550
        %v692 = vsel %vm687, %v427, %v552
        %v693 = vsel %vm687, %v428, %v554
        %v694 = vsel %vm687, %v430, %v556
        %v695 = vsel %vm687, %v431, %v558
        %v696 = vsel %vm687, %v433, %v560
        %v697 = vsel %vm687, %v434, %v562
        %v698 = vsel %vm687, %v436, %v564
        %v699 = vsel %vm687, %v437, %v566
        %v700 = vsel %vm687, %v439, %v568
        %v701 = vsel %vm687, %v440, %v570
        %v702 = vsel %vm687, %v442, %v572
        %v703 = vsel %vm687, %v443, %v574
        %vm704 = vcmask 64512
        %v705 = vsel %vm704, %v688, %v592
        %v706 = vsel %vm704, %v689, %v594
        %v707 = vsel %vm704, %v690, %v596
        %v708 = vsel %vm704, %v691, %v598
        %v709 = vsel %vm704, %v692, %v600
        %v710 = vsel %vm704, %v693, %v602
        %v711 = vsel %vm704, %v694, %v604
        %v712 = vsel %vm704, %v695, %v606
        %v713 = vsel %vm704, %v696, %v608
        %v714 = vsel %vm704, %v697, %v610
        %v715 = vsel %vm704, %v698, %v612
        %v716 = vsel %vm704, %v699, %v614
        %v717 = vsel %vm704, %v700, %v616
        %v718 = vsel %vm704, %v701, %v618
        %v719 = vsel %vm704, %v702, %v620
        %v720 = vsel %vm704, %v703, %v622
        %vm721 = vcmask 97280
        %v722 = vsel %vm721, %v705, %v640
        %v723 = vsel %vm721, %v706, %v642
        %v724 = vsel %vm721, %v707, %v644
        %v725 = vsel %vm721, %v708, %v646
        %v726 = vsel %vm721, %v709, %v648
        %v727 = vsel %vm721, %v710, %v650
        %v728 = vsel %vm721, %v711, %v652
        %v729 = vsel %vm721, %v712, %v654
        %v730 = vsel %vm721, %v713, %v656
        %v731 = vsel %vm721, %v714, %v658
        %v732 = vsel %vm721, %v715, %v660
        %v733 = vsel %vm721, %v716, %v662
        %v734 = vsel %vm721, %v717, %v664
        %v735 = vsel %vm721, %v718, %v666
        %v736 = vsel %vm721, %v719, %v668
        %v737 = vsel %vm721, %v720, %v670
        %v738 = vld [vmem:[%s416] sm:$0xff]
        %v739 = vld [vmem:[%s416 + $0x8] sm:$0xff]
        %v741 = vlaneseq
        %v742 = vshrl.u32 %v741, 7
        %v743 = vsub.s32 0, %v742
        %v744 = vrot.slane %v451, %v743
        %vm746 = vcmask 130048
        %v748 = vsel %vm746, %v722, 0
        %v751 = vsel %vm746, %v723, 0
        %v754 = vsel %vm746, %v724, 0
        %v757 = vsel %vm746, %v725, 0
        %v760 = vsel %vm746, %v726, 0
        %v763 = vsel %vm746, %v727, 0
        %v766 = vsel %vm746, %v728, 0
        %v769 = vsel %vm746, %v729, 0
        %v772 = vsel %vm746, %v730, 0
        %v775 = vsel %vm746, %v731, 0
        %v778 = vsel %vm746, %v732, 0
        %v781 = vsel %vm746, %v733, 0
        %v784 = vsel %vm746, %v734, 0
        %v787 = vsel %vm746, %v735, 0
        %v790 = vsel %vm746, %v736, 0
        %v793 = vsel %vm746, %v737, 0
        %795 = vmatprep.subr.mxu0 0.0
        %796 = vmatpush1.msra.mxu0 %v738
        %797 = vmatprep.subr.mxu0 0.0
        %798 = vmatpush1.msra.mxu0 %v739
        %799 = vmatprep.subr.mxu0 0.0
        %800 = vmatpush1.msra.mxu0 0.0
        %801 = vmatprep.subr.mxu0 0.0
        %802 = vmatpush1.msra.mxu0 0.0
        %803 = vmatprep.subr.mxu0 0.0
        %804 = vmatpush1.msra.mxu0 0.0
        %805 = vmatprep.subr.mxu0 0.0
        %806 = vmatpush1.msra.mxu0 0.0
        %807 = vmatprep.subr.mxu0 0.0
        %808 = vmatpush1.msra.mxu0 0.0
        %809 = vmatprep.subr.mxu0 0.0
        %810 = vmatpush1.msra.mxu0 0.0
        %811 = vmatprep.subr.mxu0 0.0
        %812 = vmatpush1.msra.mxu0 0.0
        %813 = vmatprep.subr.mxu0 0.0
        %814 = vmatpush1.msra.mxu0 0.0
        %815 = vmatprep.subr.mxu0 0.0
        %816 = vmatpush1.msra.mxu0 0.0
        %817 = vmatprep.subr.mxu0 0.0
        %818 = vmatpush1.msra.mxu0 0.0
        %819 = vmatprep.subr.mxu0 0.0
        %820 = vmatpush1.msra.mxu0 0.0
        %821 = vmatprep.subr.mxu0 0.0
        %822 = vmatpush1.msra.mxu0 0.0
        %823 = vmatprep.subr.mxu0 0.0
        %824 = vmatpush1.msra.mxu0 0.0
        %825 = vmatprep.subr.mxu0 0.0
        %826 = vmatpush1.msra.mxu0 0.0
        %827 = vmatprep.subr.mxu0 0.0
        %828 = vmatpush1.msra.mxu0 0.0
        %829 = vmatprep.subr.mxu0 0.0
        %830 = vmatpush1.msra.mxu0 0.0
        %831 = vmatprep.subr.mxu0 0.0
        %832 = vmatpush1.msra.mxu0 0.0
        %833 = vmatprep.subr.mxu0 0.0
        %834 = vmatpush1.msra.mxu0 0.0
        %835 = vmatprep.subr.mxu0 0.0
        %836 = vmatpush1.msra.mxu0 0.0
        %837 = vmatprep.subr.mxu0 0.0
        %838 = vmatpush1.msra.mxu0 0.0
        %839 = vmatprep.subr.mxu0 0.0
        %840 = vmatpush1.msra.mxu0 0.0
        %841 = vmatprep.subr.mxu0 0.0
        %842 = vmatpush1.msra.mxu0 0.0
        %843 = vmatprep.subr.mxu0 0.0
        %844 = vmatpush1.msra.mxu0 0.0
        %845 = vmatprep.subr.mxu0 0.0
        %846 = vmatpush1.msra.mxu0 0.0
        %847 = vmatprep.subr.mxu0 0.0
        %848 = vmatpush1.msra.mxu0 0.0
        %849 = vmatprep.subr.mxu0 0.0
        %850 = vmatpush1.msra.mxu0 0.0
        %851 = vmatprep.subr.mxu0 0.0
        %852 = vmatpush1.msra.mxu0 0.0
        %853 = vmatprep.subr.mxu0 0.0
        %854 = vmatpush1.msra.mxu0 0.0
        %855 = vmatprep.subr.mxu0 0.0
        %856 = vmatpush1.msra.mxu0 0.0
        %857 = vmatprep.subr.mxu0 0.0
        %858 = vmatpush1.msra.mxu0 0.0
        %859 = vmatprep.mubr.f32.mxu0 0.0
        %860 = vmatmul.mubr.f32.gmra.mrb[0].mxu0 %v748
        %v861 = vpop.f32.mrb[0].mxu0
        %v862 = vadd.f32 %v744, %v861
        %v863 = vpop.f32.mrb[0].mxu0
        %864 = vmatprep.mubr.f32.mxu0 0.0
        %865 = vmatmul.mubr.f32.gmra.mrb[0].mxu0 %v751
        %v866 = vpop.f32.mrb[0].mxu0
        %v867 = vadd.f32 %v744, %v866
        %v868 = vpop.f32.mrb[0].mxu0
        %869 = vmatprep.mubr.f32.mxu0 0.0
        %870 = vmatmul.mubr.f32.gmra.mrb[0].mxu0 %v754
        %v871 = vpop.f32.mrb[0].mxu0
        %v872 = vadd.f32 %v744, %v871
        %v873 = vpop.f32.mrb[0].mxu0
        %874 = vmatprep.mubr.f32.mxu0 0.0
        %875 = vmatmul.mubr.f32.gmra.mrb[0].mxu0 %v757
        %v876 = vpop.f32.mrb[0].mxu0
        %v877 = vadd.f32 %v744, %v876
        %v878 = vpop.f32.mrb[0].mxu0
        %879 = vmatprep.mubr.f32.mxu0 0.0
        %880 = vmatmul.mubr.f32.gmra.mrb[0].mxu0 %v760
        %v881 = vpop.f32.mrb[0].mxu0
        %v882 = vadd.f32 %v744, %v881
        %v883 = vpop.f32.mrb[0].mxu0
        %884 = vmatprep.mubr.f32.mxu0 0.0
        %885 = vmatmul.mubr.f32.gmra.mrb[0].mxu0 %v763
        %v886 = vpop.f32.mrb[0].mxu0
        %v887 = vadd.f32 %v744, %v886
        %v888 = vpop.f32.mrb[0].mxu0
        %889 = vmatprep.mubr.f32.mxu0 0.0
        %890 = vmatmul.mubr.f32.gmra.mrb[0].mxu0 %v766
        %v891 = vpop.f32.mrb[0].mxu0
        %v892 = vadd.f32 %v744, %v891
        %v893 = vpop.f32.mrb[0].mxu0
        %894 = vmatprep.mubr.f32.mxu0 0.0
        %895 = vmatmul.mubr.f32.gmra.mrb[0].mxu0 %v769
        %v896 = vpop.f32.mrb[0].mxu0
        %v897 = vadd.f32 %v744, %v896
        %v898 = vpop.f32.mrb[0].mxu0
        %899 = vmatprep.mubr.f32.mxu0 0.0
        %900 = vmatmul.mubr.f32.gmra.mrb[0].mxu0 %v772
        %v901 = vpop.f32.mrb[0].mxu0
        %v902 = vadd.f32 %v744, %v901
        %v903 = vpop.f32.mrb[0].mxu0
        %904 = vmatprep.mubr.f32.mxu0 0.0
        %905 = vmatmul.mubr.f32.gmra.mrb[0].mxu0 %v775
        %v906 = vpop.f32.mrb[0].mxu0
        %v907 = vadd.f32 %v744, %v906
        %v908 = vpop.f32.mrb[0].mxu0
        %909 = vmatprep.mubr.f32.mxu0 0.0
        %910 = vmatmul.mubr.f32.gmra.mrb[0].mxu0 %v778
        %v911 = vpop.f32.mrb[0].mxu0
        %v912 = vadd.f32 %v744, %v911
        %v913 = vpop.f32.mrb[0].mxu0
        %914 = vmatprep.mubr.f32.mxu0 0.0
        %915 = vmatmul.mubr.f32.gmra.mrb[0].mxu0 %v781
        %v916 = vpop.f32.mrb[0].mxu0
        %v917 = vadd.f32 %v744, %v916
        %v918 = vpop.f32.mrb[0].mxu0
        %919 = vmatprep.mubr.f32.mxu0 0.0
        %920 = vmatmul.mubr.f32.gmra.mrb[0].mxu0 %v784
        %v921 = vpop.f32.mrb[0].mxu0
        %v922 = vadd.f32 %v744, %v921
        %v923 = vpop.f32.mrb[0].mxu0
        %924 = vmatprep.mubr.f32.mxu0 0.0
        %925 = vmatmul.mubr.f32.gmra.mrb[0].mxu0 %v787
        %v926 = vpop.f32.mrb[0].mxu0
        %v927 = vadd.f32 %v744, %v926
        %v928 = vpop.f32.mrb[0].mxu0
        %929 = vmatprep.mubr.f32.mxu0 0.0
        %930 = vmatmul.mubr.f32.gmra.mrb[0].mxu0 %v790
        %v931 = vpop.f32.mrb[0].mxu0
        %v932 = vadd.f32 %v744, %v931
        %v933 = vpop.f32.mrb[0].mxu0
        %934 = vmatprep.mubr.f32.mxu0 0.0
        %935 = vmatmul.mubr.f32.gmra.mrb[0].mxu0 %v793
        %v936 = vpop.f32.mrb[0].mxu0
        %v937 = vadd.f32 %v744, %v936
        %v938 = vpop.f32.mrb[0].mxu0
        %939 = vdwg.mxu0
        %940 = vst.msk [vmem:[%s363] sm:$0xff] %vm687, %v862
        %941 = vst.msk [vmem:[%s363 + $0x8] sm:$0xff] %vm687, %v867
        %942 = vst.msk [vmem:[%s363 + $0x10] sm:$0xff] %vm687, %v872
        %943 = vst.msk [vmem:[%s363 + $0x18] sm:$0xff] %vm687, %v877
        %944 = vst.msk [vmem:[%s363 + $0x20] sm:$0xff] %vm687, %v882
        %945 = vst.msk [vmem:[%s363 + $0x28] sm:$0xff] %vm687, %v887
        %946 = vst.msk [vmem:[%s363 + $0x30] sm:$0xff] %vm687, %v892
        %947 = vst.msk [vmem:[%s363 + $0x38] sm:$0xff] %vm687, %v897
        %948 = vst.msk [vmem:[%s363 + $0x40] sm:$0xff] %vm687, %v902
        %949 = vst.msk [vmem:[%s363 + $0x48] sm:$0xff] %vm687, %v907
        %950 = vst.msk [vmem:[%s363 + $0x50] sm:$0xff] %vm687, %v912
        %951 = vst.msk [vmem:[%s363 + $0x58] sm:$0xff] %vm687, %v917
        %952 = vst.msk [vmem:[%s363 + $0x60] sm:$0xff] %vm687, %v922
        %953 = vst.msk [vmem:[%s363 + $0x68] sm:$0xff] %vm687, %v927
        %954 = vst.msk [vmem:[%s363 + $0x70] sm:$0xff] %vm687, %v932
        %955 = vst.msk [vmem:[%s363 + $0x78] sm:$0xff] %vm687, %v937
        %vm956 = vcmask 1045504
        %v957 = vrot.slane %v421, 2
        %v958 = vrot.slane %v422, 2
        %v959 = vsel %vm956, %v957, %v958
        %v960 = vrot.slane %v423, 2
        %v961 = vsel %vm956, %v958, %v960
        %v962 = vrot.slane %v424, 2
        %v963 = vrot.slane %v425, 2
        %v964 = vsel %vm956, %v962, %v963
        %v965 = vrot.slane %v426, 2
        %v966 = vsel %vm956, %v963, %v965
        %v967 = vrot.slane %v427, 2
        %v968 = vrot.slane %v428, 2
        %v969 = vsel %vm956, %v967, %v968
        %v970 = vrot.slane %v429, 2
        %v971 = vsel %vm956, %v968, %v970
        %v972 = vrot.slane %v430, 2
        %v973 = vrot.slane %v431, 2
        %v974 = vsel %vm956, %v972, %v973
        %v975 = vrot.slane %v432, 2
        %v976 = vsel %vm956, %v973, %v975
        %v977 = vrot.slane %v433, 2
        %v978 = vrot.slane %v434, 2
        %v979 = vsel %vm956, %v977, %v978
        %v980 = vrot.slane %v435, 2
        %v981 = vsel %vm956, %v978, %v980
        %v982 = vrot.slane %v436, 2
        %v983 = vrot.slane %v437, 2
        %v984 = vsel %vm956, %v982, %v983
        %v985 = vrot.slane %v438, 2
        %v986 = vsel %vm956, %v983, %v985
        %v987 = vrot.slane %v439, 2
        %v988 = vrot.slane %v440, 2
        %v989 = vsel %vm956, %v987, %v988
        %v990 = vrot.slane %v441, 2
        %v991 = vsel %vm956, %v988, %v990
        %v992 = vrot.slane %v442, 2
        %v993 = vrot.slane %v443, 2
        %v994 = vsel %vm956, %v992, %v993
        %v995 = vrot.slane %v444, 2
        %v996 = vsel %vm956, %v993, %v995
        %v997 = vrot.slane %v445, 2
        %v998 = vrot.slane %v446, 2
        %v999 = vsel %vm956, %v997, %v998
        %v1000 = vrot.slane %v447, 2
        %v1001 = vsel %vm956, %v998, %v1000
        %1002 = vrot.lane.b32.xlu0 %v959, 4
        %v1003 = vpop.permute.xlu0 %1002
        %1004 = vrot.lane.b32.xlu0 %v961, 4
        %v1005 = vpop.permute.xlu0 %1004
        %1006 = vrot.lane.b32.xlu0 %v964, 4
        %v1007 = vpop.permute.xlu0 %1006
        %1008 = vrot.lane.b32.xlu0 %v966, 4
        %v1009 = vpop.permute.xlu0 %1008
        %1010 = vrot.lane.b32.xlu0 %v969, 4
        %v1011 = vpop.permute.xlu0 %1010
        %1012 = vrot.lane.b32.xlu0 %v971, 4
        %v1013 = vpop.permute.xlu0 %1012
        %1014 = vrot.lane.b32.xlu0 %v974, 4
        %v1015 = vpop.permute.xlu0 %1014
        %1016 = vrot.lane.b32.xlu0 %v976, 4
        %v1017 = vpop.permute.xlu0 %1016
        %1018 = vrot.lane.b32.xlu0 %v979, 4
        %v1019 = vpop.permute.xlu0 %1018
        %1020 = vrot.lane.b32.xlu0 %v981, 4
        %v1021 = vpop.permute.xlu0 %1020
        %1022 = vrot.lane.b32.xlu0 %v984, 4
        %v1023 = vpop.permute.xlu0 %1022
        %1024 = vrot.lane.b32.xlu0 %v986, 4
        %v1025 = vpop.permute.xlu0 %1024
        %1026 = vrot.lane.b32.xlu0 %v989, 4
        %v1027 = vpop.permute.xlu0 %1026
        %1028 = vrot.lane.b32.xlu0 %v991, 4
        %v1029 = vpop.permute.xlu0 %1028
        %1030 = vrot.lane.b32.xlu0 %v994, 4
        %v1031 = vpop.permute.xlu0 %1030
        %1032 = vrot.lane.b32.xlu0 %v996, 4
        %v1033 = vpop.permute.xlu0 %1032
        %1050 = vrot.lane.b32.xlu0 %v484, 8
        %v1051 = vpop.permute.xlu0 %1050
        %1052 = vrot.lane.b32.xlu0 %v486, 8
        %v1053 = vpop.permute.xlu0 %1052
        %1054 = vrot.lane.b32.xlu0 %v489, 8
        %v1055 = vpop.permute.xlu0 %1054
        %1056 = vrot.lane.b32.xlu0 %v491, 8
        %v1057 = vpop.permute.xlu0 %1056
        %1058 = vrot.lane.b32.xlu0 %v494, 8
        %v1059 = vpop.permute.xlu0 %1058
        %1060 = vrot.lane.b32.xlu0 %v496, 8
        %v1061 = vpop.permute.xlu0 %1060
        %1062 = vrot.lane.b32.xlu0 %v499, 8
        %v1063 = vpop.permute.xlu0 %1062
        %1064 = vrot.lane.b32.xlu0 %v501, 8
        %v1065 = vpop.permute.xlu0 %1064
        %1066 = vrot.lane.b32.xlu0 %v504, 8
        %v1067 = vpop.permute.xlu0 %1066
        %1068 = vrot.lane.b32.xlu0 %v506, 8
        %v1069 = vpop.permute.xlu0 %1068
        %1070 = vrot.lane.b32.xlu0 %v509, 8
        %v1071 = vpop.permute.xlu0 %1070
        %1072 = vrot.lane.b32.xlu0 %v511, 8
        %v1073 = vpop.permute.xlu0 %1072
        %1074 = vrot.lane.b32.xlu0 %v514, 8
        %v1075 = vpop.permute.xlu0 %1074
        %1076 = vrot.lane.b32.xlu0 %v516, 8
        %v1077 = vpop.permute.xlu0 %1076
        %1078 = vrot.lane.b32.xlu0 %v538, 8
        %v1079 = vpop.permute.xlu0 %1078
        %1080 = vrot.lane.b32.xlu0 %v540, 8
        %v1081 = vpop.permute.xlu0 %1080
        %1098 = vrot.lane.b32.xlu0 %v964, 12
        %v1099 = vpop.permute.xlu0 %1098
        %1100 = vrot.lane.b32.xlu0 %v966, 12
        %v1101 = vpop.permute.xlu0 %1100
        %1102 = vrot.lane.b32.xlu0 %v969, 12
        %v1103 = vpop.permute.xlu0 %1102
        %1104 = vrot.lane.b32.xlu0 %v971, 12
        %v1105 = vpop.permute.xlu0 %1104
        %1106 = vrot.lane.b32.xlu0 %v974, 12
        %v1107 = vpop.permute.xlu0 %1106
        %1108 = vrot.lane.b32.xlu0 %v976, 12
        %v1109 = vpop.permute.xlu0 %1108
        %1110 = vrot.lane.b32.xlu0 %v979, 12
        %v1111 = vpop.permute.xlu0 %1110
        %1112 = vrot.lane.b32.xlu0 %v981, 12
        %v1113 = vpop.permute.xlu0 %1112
        %1114 = vrot.lane.b32.xlu0 %v984, 12
        %v1115 = vpop.permute.xlu0 %1114
        %1116 = vrot.lane.b32.xlu0 %v986, 12
        %v1117 = vpop.permute.xlu0 %1116
        %1118 = vrot.lane.b32.xlu0 %v989, 12
        %v1119 = vpop.permute.xlu0 %1118
        %1120 = vrot.lane.b32.xlu0 %v991, 12
        %v1121 = vpop.permute.xlu0 %1120
        %1122 = vrot.lane.b32.xlu0 %v994, 12
        %v1123 = vpop.permute.xlu0 %1122
        %1124 = vrot.lane.b32.xlu0 %v996, 12
        %v1125 = vpop.permute.xlu0 %1124
        %1126 = vrot.lane.b32.xlu0 %v999, 12
        %v1127 = vpop.permute.xlu0 %1126
        %1128 = vrot.lane.b32.xlu0 %v1001, 12
        %v1129 = vpop.permute.xlu0 %1128
        %v1146 = vsel %vm687, %v479, %v1003
        %v1147 = vsel %vm687, %v481, %v1005
        %v1148 = vsel %vm687, %v484, %v1007
        %v1149 = vsel %vm687, %v486, %v1009
        %v1150 = vsel %vm687, %v489, %v1011
        %v1151 = vsel %vm687, %v491, %v1013
        %v1152 = vsel %vm687, %v494, %v1015
        %v1153 = vsel %vm687, %v496, %v1017
        %v1154 = vsel %vm687, %v499, %v1019
        %v1155 = vsel %vm687, %v501, %v1021
        %v1156 = vsel %vm687, %v504, %v1023
        %v1157 = vsel %vm687, %v506, %v1025
        %v1158 = vsel %vm687, %v509, %v1027
        %v1159 = vsel %vm687, %v511, %v1029
        %v1160 = vsel %vm687, %v514, %v1031
        %v1161 = vsel %vm687, %v516, %v1033
        %v1162 = vsel %vm704, %v1146, %v1051
        %v1163 = vsel %vm704, %v1147, %v1053
        %v1164 = vsel %vm704, %v1148, %v1055
        %v1165 = vsel %vm704, %v1149, %v1057
        %v1166 = vsel %vm704, %v1150, %v1059
        %v1167 = vsel %vm704, %v1151, %v1061
        %v1168 = vsel %vm704, %v1152, %v1063
        %v1169 = vsel %vm704, %v1153, %v1065
        %v1170 = vsel %vm704, %v1154, %v1067
        %v1171 = vsel %vm704, %v1155, %v1069
        %v1172 = vsel %vm704, %v1156, %v1071
        %v1173 = vsel %vm704, %v1157, %v1073
        %v1174 = vsel %vm704, %v1158, %v1075
        %v1175 = vsel %vm704, %v1159, %v1077
        %v1176 = vsel %vm704, %v1160, %v1079
        %v1177 = vsel %vm704, %v1161, %v1081
        %v1178 = vsel %vm721, %v1162, %v1099
        %v1179 = vsel %vm721, %v1163, %v1101
        %v1180 = vsel %vm721, %v1164, %v1103
        %v1181 = vsel %vm721, %v1165, %v1105
        %v1182 = vsel %vm721, %v1166, %v1107
        %v1183 = vsel %vm721, %v1167, %v1109
        %v1184 = vsel %vm721, %v1168, %v1111
        %v1185 = vsel %vm721, %v1169, %v1113
        %v1186 = vsel %vm721, %v1170, %v1115
        %v1187 = vsel %vm721, %v1171, %v1117
        %v1188 = vsel %vm721, %v1172, %v1119
        %v1189 = vsel %vm721, %v1173, %v1121
        %v1190 = vsel %vm721, %v1174, %v1123
        %v1191 = vsel %vm721, %v1175, %v1125
        %v1192 = vsel %vm721, %v1176, %v1127
        %v1193 = vsel %vm721, %v1177, %v1129
        %s1194 = scalar_lea.vmem %s416, 16
        %v1195 = vld [vmem:[%s1194] sm:$0xff]
        %v1196 = vld [vmem:[%s1194 + $0x8] sm:$0xff]
        %v1198 = vsel %vm746, %v1178, 0
        %v1201 = vsel %vm746, %v1179, 0
        %v1204 = vsel %vm746, %v1180, 0
        %v1207 = vsel %vm746, %v1181, 0
        %v1210 = vsel %vm746, %v1182, 0
        %v1213 = vsel %vm746, %v1183, 0
        %v1216 = vsel %vm746, %v1184, 0
        %v1219 = vsel %vm746, %v1185, 0
        %v1222 = vsel %vm746, %v1186, 0
        %v1225 = vsel %vm746, %v1187, 0
        %v1228 = vsel %vm746, %v1188, 0
        %v1231 = vsel %vm746, %v1189, 0
        %v1234 = vsel %vm746, %v1190, 0
        %v1237 = vsel %vm746, %v1191, 0
        %v1240 = vsel %vm746, %v1192, 0
        %v1243 = vsel %vm746, %v1193, 0
        %1245 = vmatprep.subr.mxu0 0.0
        %1246 = vmatpush1.msra.mxu0 %v1195
        %1247 = vmatprep.subr.mxu0 0.0
        %1248 = vmatpush1.msra.mxu0 %v1196
        %1249 = vmatprep.subr.mxu0 0.0
        %1250 = vmatpush1.msra.mxu0 0.0
        %1251 = vmatprep.subr.mxu0 0.0
        %1252 = vmatpush1.msra.mxu0 0.0
        %1253 = vmatprep.subr.mxu0 0.0
        %1254 = vmatpush1.msra.mxu0 0.0
        %1255 = vmatprep.subr.mxu0 0.0
        %1256 = vmatpush1.msra.mxu0 0.0
        %1257 = vmatprep.subr.mxu0 0.0
        %1258 = vmatpush1.msra.mxu0 0.0
        %1259 = vmatprep.subr.mxu0 0.0
        %1260 = vmatpush1.msra.mxu0 0.0
        %1261 = vmatprep.subr.mxu0 0.0
        %1262 = vmatpush1.msra.mxu0 0.0
        %1263 = vmatprep.subr.mxu0 0.0
        %1264 = vmatpush1.msra.mxu0 0.0
        %1265 = vmatprep.subr.mxu0 0.0
        %1266 = vmatpush1.msra.mxu0 0.0
        %1267 = vmatprep.subr.mxu0 0.0
        %1268 = vmatpush1.msra.mxu0 0.0
        %1269 = vmatprep.subr.mxu0 0.0
        %1270 = vmatpush1.msra.mxu0 0.0
        %1271 = vmatprep.subr.mxu0 0.0
        %1272 = vmatpush1.msra.mxu0 0.0
        %1273 = vmatprep.subr.mxu0 0.0
        %1274 = vmatpush1.msra.mxu0 0.0
        %1275 = vmatprep.subr.mxu0 0.0
        %1276 = vmatpush1.msra.mxu0 0.0
        %1277 = vmatprep.subr.mxu0 0.0
        %1278 = vmatpush1.msra.mxu0 0.0
        %1279 = vmatprep.subr.mxu0 0.0
        %1280 = vmatpush1.msra.mxu0 0.0
        %1281 = vmatprep.subr.mxu0 0.0
        %1282 = vmatpush1.msra.mxu0 0.0
        %1283 = vmatprep.subr.mxu0 0.0
        %1284 = vmatpush1.msra.mxu0 0.0
        %1285 = vmatprep.subr.mxu0 0.0
        %1286 = vmatpush1.msra.mxu0 0.0
        %1287 = vmatprep.subr.mxu0 0.0
        %1288 = vmatpush1.msra.mxu0 0.0
        %1289 = vmatprep.subr.mxu0 0.0
        %1290 = vmatpush1.msra.mxu0 0.0
        %1291 = vmatprep.subr.mxu0 0.0
        %1292 = vmatpush1.msra.mxu0 0.0
        %1293 = vmatprep.subr.mxu0 0.0
        %1294 = vmatpush1.msra.mxu0 0.0
        %1295 = vmatprep.subr.mxu0 0.0
        %1296 = vmatpush1.msra.mxu0 0.0
        %1297 = vmatprep.subr.mxu0 0.0
        %1298 = vmatpush1.msra.mxu0 0.0
        %1299 = vmatprep.subr.mxu0 0.0
        %1300 = vmatpush1.msra.mxu0 0.0
        %1301 = vmatprep.subr.mxu0 0.0
        %1302 = vmatpush1.msra.mxu0 0.0
        %1303 = vmatprep.subr.mxu0 0.0
        %1304 = vmatpush1.msra.mxu0 0.0
        %1305 = vmatprep.subr.mxu0 0.0
        %1306 = vmatpush1.msra.mxu0 0.0
        %1307 = vmatprep.subr.mxu0 0.0
        %1308 = vmatpush1.msra.mxu0 0.0
        %1309 = vmatprep.mubr.f32.mxu0 0.0
        %1310 = vmatmul.mubr.f32.gmra.mrb[0].mxu0 %v1198
        %v1311 = vpop.f32.mrb[0].mxu0
        %v1312 = vadd.f32 %v744, %v1311
        %v1313 = vpop.f32.mrb[0].mxu0
        %1314 = vmatprep.mubr.f32.mxu0 0.0
        %1315 = vmatmul.mubr.f32.gmra.mrb[0].mxu0 %v1201
        %v1316 = vpop.f32.mrb[0].mxu0
        %v1317 = vadd.f32 %v744, %v1316
        %v1318 = vpop.f32.mrb[0].mxu0
        %1319 = vmatprep.mubr.f32.mxu0 0.0
        %1320 = vmatmul.mubr.f32.gmra.mrb[0].mxu0 %v1204
        %v1321 = vpop.f32.mrb[0].mxu0
        %v1322 = vadd.f32 %v744, %v1321
        %v1323 = vpop.f32.mrb[0].mxu0
        %1324 = vmatprep.mubr.f32.mxu0 0.0
        %1325 = vmatmul.mubr.f32.gmra.mrb[0].mxu0 %v1207
        %v1326 = vpop.f32.mrb[0].mxu0
        %v1327 = vadd.f32 %v744, %v1326
        %v1328 = vpop.f32.mrb[0].mxu0
        %1329 = vmatprep.mubr.f32.mxu0 0.0
        %1330 = vmatmul.mubr.f32.gmra.mrb[0].mxu0 %v1210
        %v1331 = vpop.f32.mrb[0].mxu0
        %v1332 = vadd.f32 %v744, %v1331
        %v1333 = vpop.f32.mrb[0].mxu0
        %1334 = vmatprep.mubr.f32.mxu0 0.0
        %1335 = vmatmul.mubr.f32.gmra.mrb[0].mxu0 %v1213
        %v1336 = vpop.f32.mrb[0].mxu0
        %v1337 = vadd.f32 %v744, %v1336
        %v1338 = vpop.f32.mrb[0].mxu0
        %1339 = vmatprep.mubr.f32.mxu0 0.0
        %1340 = vmatmul.mubr.f32.gmra.mrb[0].mxu0 %v1216
        %v1341 = vpop.f32.mrb[0].mxu0
        %v1342 = vadd.f32 %v744, %v1341
        %v1343 = vpop.f32.mrb[0].mxu0
        %1344 = vmatprep.mubr.f32.mxu0 0.0
        %1345 = vmatmul.mubr.f32.gmra.mrb[0].mxu0 %v1219
        %v1346 = vpop.f32.mrb[0].mxu0
        %v1347 = vadd.f32 %v744, %v1346
        %v1348 = vpop.f32.mrb[0].mxu0
        %1349 = vmatprep.mubr.f32.mxu0 0.0
        %1350 = vmatmul.mubr.f32.gmra.mrb[0].mxu0 %v1222
        %v1351 = vpop.f32.mrb[0].mxu0
        %v1352 = vadd.f32 %v744, %v1351
        %v1353 = vpop.f32.mrb[0].mxu0
        %1354 = vmatprep.mubr.f32.mxu0 0.0
        %1355 = vmatmul.mubr.f32.gmra.mrb[0].mxu0 %v1225
        %v1356 = vpop.f32.mrb[0].mxu0
        %v1357 = vadd.f32 %v744, %v1356
        %v1358 = vpop.f32.mrb[0].mxu0
        %1359 = vmatprep.mubr.f32.mxu0 0.0
        %1360 = vmatmul.mubr.f32.gmra.mrb[0].mxu0 %v1228
        %v1361 = vpop.f32.mrb[0].mxu0
        %v1362 = vadd.f32 %v744, %v1361
        %v1363 = vpop.f32.mrb[0].mxu0
        %1364 = vmatprep.mubr.f32.mxu0 0.0
        %1365 = vmatmul.mubr.f32.gmra.mrb[0].mxu0 %v1231
        %v1366 = vpop.f32.mrb[0].mxu0
        %v1367 = vadd.f32 %v744, %v1366
        %v1368 = vpop.f32.mrb[0].mxu0
        %1369 = vmatprep.mubr.f32.mxu0 0.0
        %1370 = vmatmul.mubr.f32.gmra.mrb[0].mxu0 %v1234
        %v1371 = vpop.f32.mrb[0].mxu0
        %v1372 = vadd.f32 %v744, %v1371
        %v1373 = vpop.f32.mrb[0].mxu0
        %1374 = vmatprep.mubr.f32.mxu0 0.0
        %1375 = vmatmul.mubr.f32.gmra.mrb[0].mxu0 %v1237
        %v1376 = vpop.f32.mrb[0].mxu0
        %v1377 = vadd.f32 %v744, %v1376
        %v1378 = vpop.f32.mrb[0].mxu0
        %1379 = vmatprep.mubr.f32.mxu0 0.0
        %1380 = vmatmul.mubr.f32.gmra.mrb[0].mxu0 %v1240
        %v1381 = vpop.f32.mrb[0].mxu0
        %v1382 = vadd.f32 %v744, %v1381
        %v1383 = vpop.f32.mrb[0].mxu0
        %1384 = vmatprep.mubr.f32.mxu0 0.0
        %1385 = vmatmul.mubr.f32.gmra.mrb[0].mxu0 %v1243
        %v1386 = vpop.f32.mrb[0].mxu0
        %v1387 = vadd.f32 %v744, %v1386
        %v1388 = vpop.f32.mrb[0].mxu0
        %1389 = vdwg.mxu0
        %s1390 = scalar_lea.vmem %s363, 128 [#allocation2]
        %1391 = vst.msk [vmem:[%s1390] sm:$0xff] %vm687, %v1312
        %1392 = vst.msk [vmem:[%s1390 + $0x8] sm:$0xff] %vm687, %v1317
        %1393 = vst.msk [vmem:[%s1390 + $0x10] sm:$0xff] %vm687, %v1322
        %1394 = vst.msk [vmem:[%s1390 + $0x18] sm:$0xff] %vm687, %v1327
        %1395 = vst.msk [vmem:[%s1390 + $0x20] sm:$0xff] %vm687, %v1332
        %1396 = vst.msk [vmem:[%s1390 + $0x28] sm:$0xff] %vm687, %v1337
        %1397 = vst.msk [vmem:[%s1390 + $0x30] sm:$0xff] %vm687, %v1342
        %1398 = vst.msk [vmem:[%s1390 + $0x38] sm:$0xff] %vm687, %v1347
        %1399 = vst.msk [vmem:[%s1390 + $0x40] sm:$0xff] %vm687, %v1352
        %1400 = vst.msk [vmem:[%s1390 + $0x48] sm:$0xff] %vm687, %v1357
        %1401 = vst.msk [vmem:[%s1390 + $0x50] sm:$0xff] %vm687, %v1362
        %1402 = vst.msk [vmem:[%s1390 + $0x58] sm:$0xff] %vm687, %v1367
        %1403 = vst.msk [vmem:[%s1390 + $0x60] sm:$0xff] %vm687, %v1372
        %1404 = vst.msk [vmem:[%s1390 + $0x68] sm:$0xff] %vm687, %v1377
        %1405 = vst.msk [vmem:[%s1390 + $0x70] sm:$0xff] %vm687, %v1382
        %1406 = vst.msk [vmem:[%s1390 + $0x78] sm:$0xff] %vm687, %v1387
        %v1410 = vrot.slane %v448, 1
        %v1411 = vrot.slane %v449, 1
        %v1412 = vsel %vm476, %v1410, %v1411
        %v1413 = vrot.slane %v450, 1
        %v1414 = vsel %vm476, %v1411, %v1413
        %1415 = vrot.lane.b32.xlu0 %v538, 4
        %v1416 = vpop.permute.xlu0 %1415
        %1417 = vrot.lane.b32.xlu0 %v540, 4
        %v1418 = vpop.permute.xlu0 %1417
        %1421 = vrot.lane.b32.xlu0 %v448, 8
        %v1422 = vpop.permute.xlu0 %1421
        %1423 = vrot.lane.b32.xlu0 %v449, 8
        %v1424 = vpop.permute.xlu0 %1423
        %1427 = vrot.lane.b32.xlu0 %v1412, 12
        %v1428 = vpop.permute.xlu0 %1427
        %1429 = vrot.lane.b32.xlu0 %v1414, 12
        %v1430 = vpop.permute.xlu0 %1429
        %v1433 = vsel %vm687, %v445, %v1416
        %v1434 = vsel %vm687, %v446, %v1418
        %v1435 = vsel %vm704, %v1433, %v1422
        %v1436 = vsel %vm704, %v1434, %v1424
        %v1437 = vsel %vm721, %v1435, %v1428
        %v1438 = vsel %vm721, %v1436, %v1430
        %s1439 = scalar_lea.vmem %s416, 32
        %v1440 = vld [vmem:[%s1439] sm:$0xff]
        %v1441 = vld [vmem:[%s1439 + $0x8] sm:$0xff]
        %v1443 = vsel %vm746, %v1437, 0
        %v1446 = vsel %vm746, %v1438, 0
        %1448 = vmatprep.subr.mxu0 0.0
        %1449 = vmatpush1.msra.mxu0 %v1440
        %1450 = vmatprep.subr.mxu0 0.0
        %1451 = vmatpush1.msra.mxu0 %v1441
        %1452 = vmatprep.subr.mxu0 0.0
        %1453 = vmatpush1.msra.mxu0 0.0
        %1454 = vmatprep.subr.mxu0 0.0
        %1455 = vmatpush1.msra.mxu0 0.0
        %1456 = vmatprep.subr.mxu0 0.0
        %1457 = vmatpush1.msra.mxu0 0.0
        %1458 = vmatprep.subr.mxu0 0.0
        %1459 = vmatpush1.msra.mxu0 0.0
        %1460 = vmatprep.subr.mxu0 0.0
        %1461 = vmatpush1.msra.mxu0 0.0
        %1462 = vmatprep.subr.mxu0 0.0
        %1463 = vmatpush1.msra.mxu0 0.0
        %1464 = vmatprep.subr.mxu0 0.0
        %1465 = vmatpush1.msra.mxu0 0.0
        %1466 = vmatprep.subr.mxu0 0.0
        %1467 = vmatpush1.msra.mxu0 0.0
        %1468 = vmatprep.subr.mxu0 0.0
        %1469 = vmatpush1.msra.mxu0 0.0
        %1470 = vmatprep.subr.mxu0 0.0
        %1471 = vmatpush1.msra.mxu0 0.0
        %1472 = vmatprep.subr.mxu0 0.0
        %1473 = vmatpush1.msra.mxu0 0.0
        %1474 = vmatprep.subr.mxu0 0.0
        %1475 = vmatpush1.msra.mxu0 0.0
        %1476 = vmatprep.subr.mxu0 0.0
        %1477 = vmatpush1.msra.mxu0 0.0
        %1478 = vmatprep.subr.mxu0 0.0
        %1479 = vmatpush1.msra.mxu0 0.0
        %1480 = vmatprep.subr.mxu0 0.0
        %1481 = vmatpush1.msra.mxu0 0.0
        %1482 = vmatprep.subr.mxu0 0.0
        %1483 = vmatpush1.msra.mxu0 0.0
        %1484 = vmatprep.subr.mxu0 0.0
        %1485 = vmatpush1.msra.mxu0 0.0
        %1486 = vmatprep.subr.mxu0 0.0
        %1487 = vmatpush1.msra.mxu0 0.0
        %1488 = vmatprep.subr.mxu0 0.0
        %1489 = vmatpush1.msra.mxu0 0.0
        %1490 = vmatprep.subr.mxu0 0.0
        %1491 = vmatpush1.msra.mxu0 0.0
        %1492 = vmatprep.subr.mxu0 0.0
        %1493 = vmatpush1.msra.mxu0 0.0
        %1494 = vmatprep.subr.mxu0 0.0
        %1495 = vmatpush1.msra.mxu0 0.0
        %1496 = vmatprep.subr.mxu0 0.0
        %1497 = vmatpush1.msra.mxu0 0.0
        %1498 = vmatprep.subr.mxu0 0.0
        %1499 = vmatpush1.msra.mxu0 0.0
        %1500 = vmatprep.subr.mxu0 0.0
        %1501 = vmatpush1.msra.mxu0 0.0
        %1502 = vmatprep.subr.mxu0 0.0
        %1503 = vmatpush1.msra.mxu0 0.0
        %1504 = vmatprep.subr.mxu0 0.0
        %1505 = vmatpush1.msra.mxu0 0.0
        %1506 = vmatprep.subr.mxu0 0.0
        %1507 = vmatpush1.msra.mxu0 0.0
        %1508 = vmatprep.subr.mxu0 0.0
        %1509 = vmatpush1.msra.mxu0 0.0
        %1510 = vmatprep.subr.mxu0 0.0
        %1511 = vmatpush1.msra.mxu0 0.0
        %1512 = vmatprep.mubr.f32.mxu0 0.0
        %1513 = vmatmul.mubr.f32.gmra.mrb[0].mxu0 %v754
        %v1514 = vpop.f32.mrb[0].mxu0
        %v1515 = vadd.f32 %v744, %v1514
        %v1516 = vpop.f32.mrb[0].mxu0
        %1517 = vmatprep.mubr.f32.mxu0 0.0
        %1518 = vmatmul.mubr.f32.gmra.mrb[0].mxu0 %v757
        %v1519 = vpop.f32.mrb[0].mxu0
        %v1520 = vadd.f32 %v744, %v1519
        %v1521 = vpop.f32.mrb[0].mxu0
        %1522 = vmatprep.mubr.f32.mxu0 0.0
        %1523 = vmatmul.mubr.f32.gmra.mrb[0].mxu0 %v760
        %v1524 = vpop.f32.mrb[0].mxu0
        %v1525 = vadd.f32 %v744, %v1524
        %v1526 = vpop.f32.mrb[0].mxu0
        %1527 = vmatprep.mubr.f32.mxu0 0.0
        %1528 = vmatmul.mubr.f32.gmra.mrb[0].mxu0 %v763
        %v1529 = vpop.f32.mrb[0].mxu0
        %v1530 = vadd.f32 %v744, %v1529
        %v1531 = vpop.f32.mrb[0].mxu0
        %1532 = vmatprep.mubr.f32.mxu0 0.0
        %1533 = vmatmul.mubr.f32.gmra.mrb[0].mxu0 %v766
        %v1534 = vpop.f32.mrb[0].mxu0
        %v1535 = vadd.f32 %v744, %v1534
        %v1536 = vpop.f32.mrb[0].mxu0
        %1537 = vmatprep.mubr.f32.mxu0 0.0
        %1538 = vmatmul.mubr.f32.gmra.mrb[0].mxu0 %v769
        %v1539 = vpop.f32.mrb[0].mxu0
        %v1540 = vadd.f32 %v744, %v1539
        %v1541 = vpop.f32.mrb[0].mxu0
        %1542 = vmatprep.mubr.f32.mxu0 0.0
        %1543 = vmatmul.mubr.f32.gmra.mrb[0].mxu0 %v772
        %v1544 = vpop.f32.mrb[0].mxu0
        %v1545 = vadd.f32 %v744, %v1544
        %v1546 = vpop.f32.mrb[0].mxu0
        %1547 = vmatprep.mubr.f32.mxu0 0.0
        %1548 = vmatmul.mubr.f32.gmra.mrb[0].mxu0 %v775
        %v1549 = vpop.f32.mrb[0].mxu0
        %v1550 = vadd.f32 %v744, %v1549
        %v1551 = vpop.f32.mrb[0].mxu0
        %1552 = vmatprep.mubr.f32.mxu0 0.0
        %1553 = vmatmul.mubr.f32.gmra.mrb[0].mxu0 %v778
        %v1554 = vpop.f32.mrb[0].mxu0
        %v1555 = vadd.f32 %v744, %v1554
        %v1556 = vpop.f32.mrb[0].mxu0
        %1557 = vmatprep.mubr.f32.mxu0 0.0
        %1558 = vmatmul.mubr.f32.gmra.mrb[0].mxu0 %v781
        %v1559 = vpop.f32.mrb[0].mxu0
        %v1560 = vadd.f32 %v744, %v1559
        %v1561 = vpop.f32.mrb[0].mxu0
        %1562 = vmatprep.mubr.f32.mxu0 0.0
        %1563 = vmatmul.mubr.f32.gmra.mrb[0].mxu0 %v784
        %v1564 = vpop.f32.mrb[0].mxu0
        %v1565 = vadd.f32 %v744, %v1564
        %v1566 = vpop.f32.mrb[0].mxu0
        %1567 = vmatprep.mubr.f32.mxu0 0.0
        %1568 = vmatmul.mubr.f32.gmra.mrb[0].mxu0 %v787
        %v1569 = vpop.f32.mrb[0].mxu0
        %v1570 = vadd.f32 %v744, %v1569
        %v1571 = vpop.f32.mrb[0].mxu0
        %1572 = vmatprep.mubr.f32.mxu0 0.0
        %1573 = vmatmul.mubr.f32.gmra.mrb[0].mxu0 %v790
        %v1574 = vpop.f32.mrb[0].mxu0
        %v1575 = vadd.f32 %v744, %v1574
        %v1576 = vpop.f32.mrb[0].mxu0
        %1577 = vmatprep.mubr.f32.mxu0 0.0
        %1578 = vmatmul.mubr.f32.gmra.mrb[0].mxu0 %v793
        %v1579 = vpop.f32.mrb[0].mxu0
        %v1580 = vadd.f32 %v744, %v1579
        %v1581 = vpop.f32.mrb[0].mxu0
        %1582 = vmatprep.mubr.f32.mxu0 0.0
        %1583 = vmatmul.mubr.f32.gmra.mrb[0].mxu0 %v1443
        %v1584 = vpop.f32.mrb[0].mxu0
        %v1585 = vadd.f32 %v744, %v1584
        %v1586 = vpop.f32.mrb[0].mxu0
        %1587 = vmatprep.mubr.f32.mxu0 0.0
        %1588 = vmatmul.mubr.f32.gmra.mrb[0].mxu0 %v1446
        %v1589 = vpop.f32.mrb[0].mxu0
        %v1590 = vadd.f32 %v744, %v1589
        %v1591 = vpop.f32.mrb[0].mxu0
        %1592 = vdwg.mxu0
        %s1593 = scalar_lea.vmem %s363, 256 [#allocation2]
        %1594 = vst.msk [vmem:[%s1593] sm:$0xff] %vm687, %v1515
        %1595 = vst.msk [vmem:[%s1593 + $0x8] sm:$0xff] %vm687, %v1520
        %1596 = vst.msk [vmem:[%s1593 + $0x10] sm:$0xff] %vm687, %v1525
        %1597 = vst.msk [vmem:[%s1593 + $0x18] sm:$0xff] %vm687, %v1530
        %1598 = vst.msk [vmem:[%s1593 + $0x20] sm:$0xff] %vm687, %v1535
        %1599 = vst.msk [vmem:[%s1593 + $0x28] sm:$0xff] %vm687, %v1540
        %1600 = vst.msk [vmem:[%s1593 + $0x30] sm:$0xff] %vm687, %v1545
        %1601 = vst.msk [vmem:[%s1593 + $0x38] sm:$0xff] %vm687, %v1550
        %1602 = vst.msk [vmem:[%s1593 + $0x40] sm:$0xff] %vm687, %v1555
        %1603 = vst.msk [vmem:[%s1593 + $0x48] sm:$0xff] %vm687, %v1560
        %1604 = vst.msk [vmem:[%s1593 + $0x50] sm:$0xff] %vm687, %v1565
        %1605 = vst.msk [vmem:[%s1593 + $0x58] sm:$0xff] %vm687, %v1570
        %1606 = vst.msk [vmem:[%s1593 + $0x60] sm:$0xff] %vm687, %v1575
        %1607 = vst.msk [vmem:[%s1593 + $0x68] sm:$0xff] %vm687, %v1580
        %1608 = vst.msk [vmem:[%s1593 + $0x70] sm:$0xff] %vm687, %v1585
        %1609 = vst.msk [vmem:[%s1593 + $0x78] sm:$0xff] %vm687, %v1590
        %v1610 = vrot.slane %v448, 2
        %v1611 = vrot.slane %v449, 2
        %v1612 = vsel %vm956, %v1610, %v1611
        %v1613 = vrot.slane %v450, 2
        %v1614 = vsel %vm956, %v1611, %v1613
        %1615 = vrot.lane.b32.xlu0 %v999, 4
        %v1616 = vpop.permute.xlu0 %1615
        %1617 = vrot.lane.b32.xlu0 %v1001, 4
        %v1618 = vpop.permute.xlu0 %1617
        %1621 = vrot.lane.b32.xlu0 %v1412, 8
        %v1622 = vpop.permute.xlu0 %1621
        %1623 = vrot.lane.b32.xlu0 %v1414, 8
        %v1624 = vpop.permute.xlu0 %1623
        %1627 = vrot.lane.b32.xlu0 %v1612, 12
        %v1628 = vpop.permute.xlu0 %1627
        %1629 = vrot.lane.b32.xlu0 %v1614, 12
        %v1630 = vpop.permute.xlu0 %1629
        %v1633 = vsel %vm687, %v538, %v1616
        %v1634 = vsel %vm687, %v540, %v1618
        %v1635 = vsel %vm704, %v1633, %v1622
        %v1636 = vsel %vm704, %v1634, %v1624
        %v1637 = vsel %vm721, %v1635, %v1628
        %v1638 = vsel %vm721, %v1636, %v1630
        %s1639 = scalar_lea.vmem %s416, 48
        %v1640 = vld [vmem:[%s1639] sm:$0xff]
        %v1641 = vld [vmem:[%s1639 + $0x8] sm:$0xff]
        %v1643 = vsel %vm746, %v1637, 0
        %v1646 = vsel %vm746, %v1638, 0
        %1648 = vmatprep.subr.mxu0 0.0
        %1649 = vmatpush1.msra.mxu0 %v1640
        %1650 = vmatprep.subr.mxu0 0.0
        %1651 = vmatpush1.msra.mxu0 %v1641
        %1652 = vmatprep.subr.mxu0 0.0
        %1653 = vmatpush1.msra.mxu0 0.0
        %1654 = vmatprep.subr.mxu0 0.0
        %1655 = vmatpush1.msra.mxu0 0.0
        %1656 = vmatprep.subr.mxu0 0.0
        %1657 = vmatpush1.msra.mxu0 0.0
        %1658 = vmatprep.subr.mxu0 0.0
        %1659 = vmatpush1.msra.mxu0 0.0
        %1660 = vmatprep.subr.mxu0 0.0
        %1661 = vmatpush1.msra.mxu0 0.0
        %1662 = vmatprep.subr.mxu0 0.0
        %1663 = vmatpush1.msra.mxu0 0.0
        %1664 = vmatprep.subr.mxu0 0.0
        %1665 = vmatpush1.msra.mxu0 0.0
        %1666 = vmatprep.subr.mxu0 0.0
        %1667 = vmatpush1.msra.mxu0 0.0
        %1668 = vmatprep.subr.mxu0 0.0
        %1669 = vmatpush1.msra.mxu0 0.0
        %1670 = vmatprep.subr.mxu0 0.0
        %1671 = vmatpush1.msra.mxu0 0.0
        %1672 = vmatprep.subr.mxu0 0.0
        %1673 = vmatpush1.msra.mxu0 0.0
        %1674 = vmatprep.subr.mxu0 0.0
        %1675 = vmatpush1.msra.mxu0 0.0
        %1676 = vmatprep.subr.mxu0 0.0
        %1677 = vmatpush1.msra.mxu0 0.0
        %1678 = vmatprep.subr.mxu0 0.0
        %1679 = vmatpush1.msra.mxu0 0.0
        %1680 = vmatprep.subr.mxu0 0.0
        %1681 = vmatpush1.msra.mxu0 0.0
        %1682 = vmatprep.subr.mxu0 0.0
        %1683 = vmatpush1.msra.mxu0 0.0
        %1684 = vmatprep.subr.mxu0 0.0
        %1685 = vmatpush1.msra.mxu0 0.0
        %1686 = vmatprep.subr.mxu0 0.0
        %1687 = vmatpush1.msra.mxu0 0.0
        %1688 = vmatprep.subr.mxu0 0.0
        %1689 = vmatpush1.msra.mxu0 0.0
        %1690 = vmatprep.subr.mxu0 0.0
        %1691 = vmatpush1.msra.mxu0 0.0
        %1692 = vmatprep.subr.mxu0 0.0
        %1693 = vmatpush1.msra.mxu0 0.0
        %1694 = vmatprep.subr.mxu0 0.0
        %1695 = vmatpush1.msra.mxu0 0.0
        %1696 = vmatprep.subr.mxu0 0.0
        %1697 = vmatpush1.msra.mxu0 0.0
        %1698 = vmatprep.subr.mxu0 0.0
        %1699 = vmatpush1.msra.mxu0 0.0
        %1700 = vmatprep.subr.mxu0 0.0
        %1701 = vmatpush1.msra.mxu0 0.0
        %1702 = vmatprep.subr.mxu0 0.0
        %1703 = vmatpush1.msra.mxu0 0.0
        %1704 = vmatprep.subr.mxu0 0.0
        %1705 = vmatpush1.msra.mxu0 0.0
        %1706 = vmatprep.subr.mxu0 0.0
        %1707 = vmatpush1.msra.mxu0 0.0
        %1708 = vmatprep.subr.mxu0 0.0
        %1709 = vmatpush1.msra.mxu0 0.0
        %1710 = vmatprep.subr.mxu0 0.0
        %1711 = vmatpush1.msra.mxu0 0.0
        %1712 = vmatprep.mubr.f32.mxu0 0.0
        %1713 = vmatmul.mubr.f32.gmra.mrb[0].mxu0 %v1204
        %v1714 = vpop.f32.mrb[0].mxu0
        %v1715 = vadd.f32 %v744, %v1714
        %v1716 = vpop.f32.mrb[0].mxu0
        %1717 = vmatprep.mubr.f32.mxu0 0.0
        %1718 = vmatmul.mubr.f32.gmra.mrb[0].mxu0 %v1207
        %v1719 = vpop.f32.mrb[0].mxu0
        %v1720 = vadd.f32 %v744, %v1719
        %v1721 = vpop.f32.mrb[0].mxu0
        %1722 = vmatprep.mubr.f32.mxu0 0.0
        %1723 = vmatmul.mubr.f32.gmra.mrb[0].mxu0 %v1210
        %v1724 = vpop.f32.mrb[0].mxu0
        %v1725 = vadd.f32 %v744, %v1724
        %v1726 = vpop.f32.mrb[0].mxu0
        %1727 = vmatprep.mubr.f32.mxu0 0.0
        %1728 = vmatmul.mubr.f32.gmra.mrb[0].mxu0 %v1213
        %v1729 = vpop.f32.mrb[0].mxu0
        %v1730 = vadd.f32 %v744, %v1729
        %v1731 = vpop.f32.mrb[0].mxu0
        %1732 = vmatprep.mubr.f32.mxu0 0.0
        %1733 = vmatmul.mubr.f32.gmra.mrb[0].mxu0 %v1216
        %v1734 = vpop.f32.mrb[0].mxu0
        %v1735 = vadd.f32 %v744, %v1734
        %v1736 = vpop.f32.mrb[0].mxu0
        %1737 = vmatprep.mubr.f32.mxu0 0.0
        %1738 = vmatmul.mubr.f32.gmra.mrb[0].mxu0 %v1219
        %v1739 = vpop.f32.mrb[0].mxu0
        %v1740 = vadd.f32 %v744, %v1739
        %v1741 = vpop.f32.mrb[0].mxu0
        %1742 = vmatprep.mubr.f32.mxu0 0.0
        %1743 = vmatmul.mubr.f32.gmra.mrb[0].mxu0 %v1222
        %v1744 = vpop.f32.mrb[0].mxu0
        %v1745 = vadd.f32 %v744, %v1744
        %v1746 = vpop.f32.mrb[0].mxu0
        %1747 = vmatprep.mubr.f32.mxu0 0.0
        %1748 = vmatmul.mubr.f32.gmra.mrb[0].mxu0 %v1225
        %v1749 = vpop.f32.mrb[0].mxu0
        %v1750 = vadd.f32 %v744, %v1749
        %v1751 = vpop.f32.mrb[0].mxu0
        %1752 = vmatprep.mubr.f32.mxu0 0.0
        %1753 = vmatmul.mubr.f32.gmra.mrb[0].mxu0 %v1228
        %v1754 = vpop.f32.mrb[0].mxu0
        %v1755 = vadd.f32 %v744, %v1754
        %v1756 = vpop.f32.mrb[0].mxu0
        %1757 = vmatprep.mubr.f32.mxu0 0.0
        %1758 = vmatmul.mubr.f32.gmra.mrb[0].mxu0 %v1231
        %v1759 = vpop.f32.mrb[0].mxu0
        %v1760 = vadd.f32 %v744, %v1759
        %v1761 = vpop.f32.mrb[0].mxu0
        %1762 = vmatprep.mubr.f32.mxu0 0.0
        %1763 = vmatmul.mubr.f32.gmra.mrb[0].mxu0 %v1234
        %v1764 = vpop.f32.mrb[0].mxu0
        %v1765 = vadd.f32 %v744, %v1764
        %v1766 = vpop.f32.mrb[0].mxu0
        %1767 = vmatprep.mubr.f32.mxu0 0.0
        %1768 = vmatmul.mubr.f32.gmra.mrb[0].mxu0 %v1237
        %v1769 = vpop.f32.mrb[0].mxu0
        %v1770 = vadd.f32 %v744, %v1769
        %v1771 = vpop.f32.mrb[0].mxu0
        %1772 = vmatprep.mubr.f32.mxu0 0.0
        %1773 = vmatmul.mubr.f32.gmra.mrb[0].mxu0 %v1240
        %v1774 = vpop.f32.mrb[0].mxu0
        %v1775 = vadd.f32 %v744, %v1774
        %v1776 = vpop.f32.mrb[0].mxu0
        %1777 = vmatprep.mubr.f32.mxu0 0.0
        %1778 = vmatmul.mubr.f32.gmra.mrb[0].mxu0 %v1243
        %v1779 = vpop.f32.mrb[0].mxu0
        %v1780 = vadd.f32 %v744, %v1779
        %v1781 = vpop.f32.mrb[0].mxu0
        %1782 = vmatprep.mubr.f32.mxu0 0.0
        %1783 = vmatmul.mubr.f32.gmra.mrb[0].mxu0 %v1643
        %v1784 = vpop.f32.mrb[0].mxu0
        %v1785 = vadd.f32 %v744, %v1784
        %v1786 = vpop.f32.mrb[0].mxu0
        %1787 = vmatprep.mubr.f32.mxu0 0.0
        %1788 = vmatmul.mubr.f32.gmra.mrb[0].mxu0 %v1646
        %v1789 = vpop.f32.mrb[0].mxu0
        %v1790 = vadd.f32 %v744, %v1789
        %v1791 = vpop.f32.mrb[0].mxu0
        %1792 = vdwg.mxu0
        %s1793 = scalar_lea.vmem %s363, 384 [#allocation2]
        %1794 = vst.msk [vmem:[%s1793] sm:$0xff] %vm687, %v1715
        %1795 = vst.msk [vmem:[%s1793 + $0x8] sm:$0xff] %vm687, %v1720
        %1796 = vst.msk [vmem:[%s1793 + $0x10] sm:$0xff] %vm687, %v1725
        %1797 = vst.msk [vmem:[%s1793 + $0x18] sm:$0xff] %vm687, %v1730
        %1798 = vst.msk [vmem:[%s1793 + $0x20] sm:$0xff] %vm687, %v1735
        %1799 = vst.msk [vmem:[%s1793 + $0x28] sm:$0xff] %vm687, %v1740
        %1800 = vst.msk [vmem:[%s1793 + $0x30] sm:$0xff] %vm687, %v1745
        %1801 = vst.msk [vmem:[%s1793 + $0x38] sm:$0xff] %vm687, %v1750
        %1802 = vst.msk [vmem:[%s1793 + $0x40] sm:$0xff] %vm687, %v1755
        %1803 = vst.msk [vmem:[%s1793 + $0x48] sm:$0xff] %vm687, %v1760
        %1804 = vst.msk [vmem:[%s1793 + $0x50] sm:$0xff] %vm687, %v1765
        %1805 = vst.msk [vmem:[%s1793 + $0x58] sm:$0xff] %vm687, %v1770
        %1806 = vst.msk [vmem:[%s1793 + $0x60] sm:$0xff] %vm687, %v1775
        %1807 = vst.msk [vmem:[%s1793 + $0x68] sm:$0xff] %vm687, %v1780
        %1808 = vst.msk [vmem:[%s1793 + $0x70] sm:$0xff] %vm687, %v1785
        %1809 = vst.msk [vmem:[%s1793 + $0x78] sm:$0xff] %vm687, %v1790
        %s1810 = sand.u32 %s193, 1
        %s1811 = sand.u32 %s193, 1
        %s1812 = smul.addr %s1811, 512
        %s1813 = scalar_lea.vmem [#allocation2], %s1812
        // Predicated region
        $region41: #{upsample_forward.1} parent=39 // pred_check
          %p1814 = pneg %p203
        $region42: #{upsample_forward.1} parent=39 // pred_check_branch
          %1816 = sbr.rel (%p1814) target = $region44
        $region43: #{upsample_forward.1} parent=39 // pred_region
          %s1817 = smul.u32 8, %s22
          %s1818 = smul.addr %s1817, 2
          %s1819 = sadd.s32 %s23, %s1818
          %s1820 = smul.addr %s21, 128
          %s1821 = sadd.s32 %s1819, %s1820
          %s1822 = smul.addr %s1821, 8
          %s1823 = scalar_lea.vmem %s5, %s1822
          // Predicated region
          $region45: #{upsample_forward.1} parent=43 // pred_check
            _
          $region46: #{upsample_forward.1} parent=43 // pred_check_branch
            %1825 = sbr.rel (0) target = $region48
          $region47: #{upsample_forward.1} parent=43 // pred_region
            // Predicated region
            $region49: #{upsample_forward.1} parent=47 // pred_check
              _
            $region50: #{upsample_forward.1} parent=47 // pred_check_branch
              %1827 = sbr.rel (0) target = $region52
            $region51: #{upsample_forward.1} parent=47 // pred_region
              // Predicated region
              $region64: #{upsample_forward.1} parent=51 // pred_check
                _
              $region65: #{upsample_forward.1} parent=51 // pred_check_branch
                %1968 = sbr.rel (0) target = $region67
              $region66: #{upsample_forward.1} parent=51 // pred_region
                loop: start=0, step=1, limit=1
                $region68: #{upsample_forward.1} parent=66 // loop_pre_header
                  _
                $region69: #{upsample_forward.1} parent=66 // loop_header
                  %s1970 = sphi 0, %s1974
                  %p1971 = scmp.ge.s32.totalorder %s1970, 1
                  %s1975 = sphi %s1813, %s1813
                  %s1976 = sphi %s1823, %s1823
                $region70: #{upsample_forward.1} parent=66 // loop_header_branch
                  %1973 = sbr.rel (%p1971) target = $region74
                $region71: #{upsample_forward.1} parent=66 // loop_body
                  %v1977 = vld [vmem:[%s1975] sm:$0xff]
                  %1978 = vst [vmem:[%s1976] sm:$0xff] %v1977
                  %v1979 = vld [vmem:[%s1975 + $0x8] sm:$0xff]
                  %1980 = vst [vmem:[%s1976 + $0x8] sm:$0xff] %v1979
                  %v1981 = vld [vmem:[%s1975 + $0x10] sm:$0xff]
                  %1982 = vst [vmem:[%s1976 + $0x10] sm:$0xff] %v1981
                  %v1983 = vld [vmem:[%s1975 + $0x18] sm:$0xff]
                  %1984 = vst [vmem:[%s1976 + $0x18] sm:$0xff] %v1983
                  %v1985 = vld [vmem:[%s1975 + $0x20] sm:$0xff]
                  %1986 = vst [vmem:[%s1976 + $0x20] sm:$0xff] %v1985
                  %v1987 = vld [vmem:[%s1975 + $0x28] sm:$0xff]
                  %1988 = vst [vmem:[%s1976 + $0x28] sm:$0xff] %v1987
                  %v1989 = vld [vmem:[%s1975 + $0x30] sm:$0xff]
                  %1990 = vst [vmem:[%s1976 + $0x30] sm:$0xff] %v1989
                  %v1991 = vld [vmem:[%s1975 + $0x38] sm:$0xff]
                  %1992 = vst [vmem:[%s1976 + $0x38] sm:$0xff] %v1991
                  %v1993 = vld [vmem:[%s1975 + $0x40] sm:$0xff]
                  %1994 = vst [vmem:[%s1976 + $0x40] sm:$0xff] %v1993
                  %v1995 = vld [vmem:[%s1975 + $0x48] sm:$0xff]
                  %1996 = vst [vmem:[%s1976 + $0x48] sm:$0xff] %v1995
                  %v1997 = vld [vmem:[%s1975 + $0x50] sm:$0xff]
                  %1998 = vst [vmem:[%s1976 + $0x50] sm:$0xff] %v1997
                  %v1999 = vld [vmem:[%s1975 + $0x58] sm:$0xff]
                  %2000 = vst [vmem:[%s1976 + $0x58] sm:$0xff] %v1999
                  %v2001 = vld [vmem:[%s1975 + $0x60] sm:$0xff]
                  %2002 = vst [vmem:[%s1976 + $0x60] sm:$0xff] %v2001
                  %v2003 = vld [vmem:[%s1975 + $0x68] sm:$0xff]
                  %2004 = vst [vmem:[%s1976 + $0x68] sm:$0xff] %v2003
                  %v2005 = vld [vmem:[%s1975 + $0x70] sm:$0xff]
                  %2006 = vst [vmem:[%s1976 + $0x70] sm:$0xff] %v2005
                  %v2007 = vld [vmem:[%s1975 + $0x78] sm:$0xff]
                  %2008 = vst [vmem:[%s1976 + $0x78] sm:$0xff] %v2007
                  %v2009 = vld [vmem:[%s1975 + $0x80] sm:$0xff]
                  %2010 = vst [vmem:[%s1976 + $0x100] sm:$0xff] %v2009
                  %v2011 = vld [vmem:[%s1975 + $0x88] sm:$0xff]
                  %2012 = vst [vmem:[%s1976 + $0x108] sm:$0xff] %v2011
                  %v2013 = vld [vmem:[%s1975 + $0x90] sm:$0xff]
                  %2014 = vst [vmem:[%s1976 + $0x110] sm:$0xff] %v2013
                  %v2015 = vld [vmem:[%s1975 + $0x98] sm:$0xff]
                  %2016 = vst [vmem:[%s1976 + $0x118] sm:$0xff] %v2015
                  %v2017 = vld [vmem:[%s1975 + $0xa0] sm:$0xff]
                  %2018 = vst [vmem:[%s1976 + $0x120] sm:$0xff] %v2017
                  %v2019 = vld [vmem:[%s1975 + $0xa8] sm:$0xff]
                  %2020 = vst [vmem:[%s1976 + $0x128] sm:$0xff] %v2019
                  %v2021 = vld [vmem:[%s1975 + $0xb0] sm:$0xff]
                  %2022 = vst [vmem:[%s1976 + $0x130] sm:$0xff] %v2021
                  %v2023 = vld [vmem:[%s1975 + $0xb8] sm:$0xff]
                  %2024 = vst [vmem:[%s1976 + $0x138] sm:$0xff] %v2023
                  %v2025 = vld [vmem:[%s1975 + $0xc0] sm:$0xff]
                  %2026 = vst [vmem:[%s1976 + $0x140] sm:$0xff] %v2025
                  %v2027 = vld [vmem:[%s1975 + $0xc8] sm:$0xff]
                  %2028 = vst [vmem:[%s1976 + $0x148] sm:$0xff] %v2027
                  %v2029 = vld [vmem:[%s1975 + $0xd0] sm:$0xff]
                  %2030 = vst [vmem:[%s1976 + $0x150] sm:$0xff] %v2029
                  %v2031 = vld [vmem:[%s1975 + $0xd8] sm:$0xff]
                  %2032 = vst [vmem:[%s1976 + $0x158] sm:$0xff] %v2031
                  %v2033 = vld [vmem:[%s1975 + $0xe0] sm:$0xff]
                  %2034 = vst [vmem:[%s1976 + $0x160] sm:$0xff] %v2033
                  %v2035 = vld [vmem:[%s1975 + $0xe8] sm:$0xff]
                  %2036 = vst [vmem:[%s1976 + $0x168] sm:$0xff] %v2035
                  %v2037 = vld [vmem:[%s1975 + $0xf0] sm:$0xff]
                  %2038 = vst [vmem:[%s1976 + $0x170] sm:$0xff] %v2037
                  %v2039 = vld [vmem:[%s1975 + $0xf8] sm:$0xff]
                  %2040 = vst [vmem:[%s1976 + $0x178] sm:$0xff] %v2039
                  %v2041 = vld [vmem:[%s1975 + $0x100] sm:$0xff]
                  %2042 = vst [vmem:[%s1976 + $0x200] sm:$0xff] %v2041
                  %v2043 = vld [vmem:[%s1975 + $0x108] sm:$0xff]
                  %2044 = vst [vmem:[%s1976 + $0x208] sm:$0xff] %v2043
                  %v2045 = vld [vmem:[%s1975 + $0x110] sm:$0xff]
                  %2046 = vst [vmem:[%s1976 + $0x210] sm:$0xff] %v2045
                  %v2047 = vld [vmem:[%s1975 + $0x118] sm:$0xff]
                  %2048 = vst [vmem:[%s1976 + $0x218] sm:$0xff] %v2047
                  %v2049 = vld [vmem:[%s1975 + $0x120] sm:$0xff]
                  %2050 = vst [vmem:[%s1976 + $0x220] sm:$0xff] %v2049
                  %v2051 = vld [vmem:[%s1975 + $0x128] sm:$0xff]
                  %2052 = vst [vmem:[%s1976 + $0x228] sm:$0xff] %v2051
                  %v2053 = vld [vmem:[%s1975 + $0x130] sm:$0xff]
                  %2054 = vst [vmem:[%s1976 + $0x230] sm:$0xff] %v2053
                  %v2055 = vld [vmem:[%s1975 + $0x138] sm:$0xff]
                  %2056 = vst [vmem:[%s1976 + $0x238] sm:$0xff] %v2055
                  %v2057 = vld [vmem:[%s1975 + $0x140] sm:$0xff]
                  %2058 = vst [vmem:[%s1976 + $0x240] sm:$0xff] %v2057
                  %v2059 = vld [vmem:[%s1975 + $0x148] sm:$0xff]
                  %2060 = vst [vmem:[%s1976 + $0x248] sm:$0xff] %v2059
                  %v2061 = vld [vmem:[%s1975 + $0x150] sm:$0xff]
                  %2062 = vst [vmem:[%s1976 + $0x250] sm:$0xff] %v2061
                  %v2063 = vld [vmem:[%s1975 + $0x158] sm:$0xff]
                  %2064 = vst [vmem:[%s1976 + $0x258] sm:$0xff] %v2063
                  %v2065 = vld [vmem:[%s1975 + $0x160] sm:$0xff]
                  %2066 = vst [vmem:[%s1976 + $0x260] sm:$0xff] %v2065
                  %v2067 = vld [vmem:[%s1975 + $0x168] sm:$0xff]
                  %2068 = vst [vmem:[%s1976 + $0x268] sm:$0xff] %v2067
                  %v2069 = vld [vmem:[%s1975 + $0x170] sm:$0xff]
                  %2070 = vst [vmem:[%s1976 + $0x270] sm:$0xff] %v2069
                  %v2071 = vld [vmem:[%s1975 + $0x178] sm:$0xff]
                  %2072 = vst [vmem:[%s1976 + $0x278] sm:$0xff] %v2071
                  %v2073 = vld [vmem:[%s1975 + $0x180] sm:$0xff]
                  %2074 = vst [vmem:[%s1976 + $0x300] sm:$0xff] %v2073
                  %v2075 = vld [vmem:[%s1975 + $0x188] sm:$0xff]
                  %2076 = vst [vmem:[%s1976 + $0x308] sm:$0xff] %v2075
                  %v2077 = vld [vmem:[%s1975 + $0x190] sm:$0xff]
                  %2078 = vst [vmem:[%s1976 + $0x310] sm:$0xff] %v2077
                  %v2079 = vld [vmem:[%s1975 + $0x198] sm:$0xff]
                  %2080 = vst [vmem:[%s1976 + $0x318] sm:$0xff] %v2079
                  %v2081 = vld [vmem:[%s1975 + $0x1a0] sm:$0xff]
                  %2082 = vst [vmem:[%s1976 + $0x320] sm:$0xff] %v2081
                  %v2083 = vld [vmem:[%s1975 + $0x1a8] sm:$0xff]
                  %2084 = vst [vmem:[%s1976 + $0x328] sm:$0xff] %v2083
                  %v2085 = vld [vmem:[%s1975 + $0x1b0] sm:$0xff]
                  %2086 = vst [vmem:[%s1976 + $0x330] sm:$0xff] %v2085
                  %v2087 = vld [vmem:[%s1975 + $0x1b8] sm:$0xff]
                  %2088 = vst [vmem:[%s1976 + $0x338] sm:$0xff] %v2087
                  %v2089 = vld [vmem:[%s1975 + $0x1c0] sm:$0xff]
                  %2090 = vst [vmem:[%s1976 + $0x340] sm:$0xff] %v2089
                  %v2091 = vld [vmem:[%s1975 + $0x1c8] sm:$0xff]
                  %2092 = vst [vmem:[%s1976 + $0x348] sm:$0xff] %v2091
                  %v2093 = vld [vmem:[%s1975 + $0x1d0] sm:$0xff]
                  %2094 = vst [vmem:[%s1976 + $0x350] sm:$0xff] %v2093
                  %v2095 = vld [vmem:[%s1975 + $0x1d8] sm:$0xff]
                  %2096 = vst [vmem:[%s1976 + $0x358] sm:$0xff] %v2095
                  %v2097 = vld [vmem:[%s1975 + $0x1e0] sm:$0xff]
                  %2098 = vst [vmem:[%s1976 + $0x360] sm:$0xff] %v2097
                  %v2099 = vld [vmem:[%s1975 + $0x1e8] sm:$0xff]
                  %2100 = vst [vmem:[%s1976 + $0x368] sm:$0xff] %v2099
                  %v2101 = vld [vmem:[%s1975 + $0x1f0] sm:$0xff]
                  %2102 = vst [vmem:[%s1976 + $0x370] sm:$0xff] %v2101
                  %v2103 = vld [vmem:[%s1975 + $0x1f8] sm:$0xff]
                  %2104 = vst [vmem:[%s1976 + $0x378] sm:$0xff] %v2103
                $region72: #{upsample_forward.1} parent=66 // loop_footer
                  %s1974 = sadd.s32 1, %s1970
                $region73: #{upsample_forward.1} parent=66 // loop_footer_branch
                  %1969 = sbr.rel target = $region69
                $region74: #{upsample_forward.1} parent=66 // loop_exit
                  _
              $region67: #{upsample_forward.1} parent=51 // pred_fallthru
                _
              // Predicated region
              $region75: #{upsample_forward.1} parent=51 // pred_check
                _
              $region76: #{upsample_forward.1} parent=51 // pred_check_branch
                %2106 = sbr.rel target = $region78
              $region77: #{upsample_forward.1} parent=51 // pred_region
                _
              $region78: #{upsample_forward.1} parent=51 // pred_fallthru
                _
            $region52: #{upsample_forward.1} parent=47 // pred_fallthru
              _
            // Predicated region
            $region53: #{upsample_forward.1} parent=47 // pred_check
              _
            $region54: #{upsample_forward.1} parent=47 // pred_check_branch
              %1829 = sbr.rel target = $region56
            $region55: #{upsample_forward.1} parent=47 // pred_region
              loop: start=0, step=1, limit=1
              $region57: #{upsample_forward.1} parent=55 // loop_pre_header
                _
              $region58: #{upsample_forward.1} parent=55 // loop_header
                %s1832 = sphi 0, %s1836
                %p1833 = scmp.ge.s32.totalorder %s1832, 1
                %s1837 = sphi %s1813, %s1813
                %s1838 = sphi %s1823, %s1823
              $region59: #{upsample_forward.1} parent=55 // loop_header_branch
                %1835 = sbr.rel (%p1833) target = $region63
              $region60: #{upsample_forward.1} parent=55 // loop_body
                %v1839 = vld [vmem:[%s1837] sm:$0xff]
                %1840 = vst [vmem:[%s1838] sm:$0xff] %v1839
                %v1841 = vld [vmem:[%s1837 + $0x8] sm:$0xff]
                %1842 = vst [vmem:[%s1838 + $0x8] sm:$0xff] %v1841
                %v1843 = vld [vmem:[%s1837 + $0x10] sm:$0xff]
                %1844 = vst [vmem:[%s1838 + $0x10] sm:$0xff] %v1843
                %v1845 = vld [vmem:[%s1837 + $0x18] sm:$0xff]
                %1846 = vst [vmem:[%s1838 + $0x18] sm:$0xff] %v1845
                %v1847 = vld [vmem:[%s1837 + $0x20] sm:$0xff]
                %1848 = vst [vmem:[%s1838 + $0x20] sm:$0xff] %v1847
                %v1849 = vld [vmem:[%s1837 + $0x28] sm:$0xff]
                %1850 = vst [vmem:[%s1838 + $0x28] sm:$0xff] %v1849
                %v1851 = vld [vmem:[%s1837 + $0x30] sm:$0xff]
                %1852 = vst [vmem:[%s1838 + $0x30] sm:$0xff] %v1851
                %v1853 = vld [vmem:[%s1837 + $0x38] sm:$0xff]
                %1854 = vst [vmem:[%s1838 + $0x38] sm:$0xff] %v1853
                %v1855 = vld [vmem:[%s1837 + $0x40] sm:$0xff]
                %1856 = vst [vmem:[%s1838 + $0x40] sm:$0xff] %v1855
                %v1857 = vld [vmem:[%s1837 + $0x48] sm:$0xff]
                %1858 = vst [vmem:[%s1838 + $0x48] sm:$0xff] %v1857
                %v1859 = vld [vmem:[%s1837 + $0x50] sm:$0xff]
                %1860 = vst [vmem:[%s1838 + $0x50] sm:$0xff] %v1859
                %v1861 = vld [vmem:[%s1837 + $0x58] sm:$0xff]
                %1862 = vst [vmem:[%s1838 + $0x58] sm:$0xff] %v1861
                %v1863 = vld [vmem:[%s1837 + $0x60] sm:$0xff]
                %1864 = vst [vmem:[%s1838 + $0x60] sm:$0xff] %v1863
                %v1865 = vld [vmem:[%s1837 + $0x68] sm:$0xff]
                %1866 = vst [vmem:[%s1838 + $0x68] sm:$0xff] %v1865
                %v1867 = vld [vmem:[%s1837 + $0x70] sm:$0xff]
                %1868 = vst [vmem:[%s1838 + $0x70] sm:$0xff] %v1867
                %v1869 = vld [vmem:[%s1837 + $0x78] sm:$0xff]
                %1870 = vst [vmem:[%s1838 + $0x78] sm:$0xff] %v1869
                %v1871 = vld [vmem:[%s1837 + $0x80] sm:$0xff]
                %1872 = vst [vmem:[%s1838 + $0x100] sm:$0xff] %v1871
                %v1873 = vld [vmem:[%s1837 + $0x88] sm:$0xff]
                %1874 = vst [vmem:[%s1838 + $0x108] sm:$0xff] %v1873
                %v1875 = vld [vmem:[%s1837 + $0x90] sm:$0xff]
                %1876 = vst [vmem:[%s1838 + $0x110] sm:$0xff] %v1875
                %v1877 = vld [vmem:[%s1837 + $0x98] sm:$0xff]
                %1878 = vst [vmem:[%s1838 + $0x118] sm:$0xff] %v1877
                %v1879 = vld [vmem:[%s1837 + $0xa0] sm:$0xff]
                %1880 = vst [vmem:[%s1838 + $0x120] sm:$0xff] %v1879
                %v1881 = vld [vmem:[%s1837 + $0xa8] sm:$0xff]
                %1882 = vst [vmem:[%s1838 + $0x128] sm:$0xff] %v1881
                %v1883 = vld [vmem:[%s1837 + $0xb0] sm:$0xff]
                %1884 = vst [vmem:[%s1838 + $0x130] sm:$0xff] %v1883
                %v1885 = vld [vmem:[%s1837 + $0xb8] sm:$0xff]
                %1886 = vst [vmem:[%s1838 + $0x138] sm:$0xff] %v1885
                %v1887 = vld [vmem:[%s1837 + $0xc0] sm:$0xff]
                %1888 = vst [vmem:[%s1838 + $0x140] sm:$0xff] %v1887
                %v1889 = vld [vmem:[%s1837 + $0xc8] sm:$0xff]
                %1890 = vst [vmem:[%s1838 + $0x148] sm:$0xff] %v1889
                %v1891 = vld [vmem:[%s1837 + $0xd0] sm:$0xff]
                %1892 = vst [vmem:[%s1838 + $0x150] sm:$0xff] %v1891
                %v1893 = vld [vmem:[%s1837 + $0xd8] sm:$0xff]
                %1894 = vst [vmem:[%s1838 + $0x158] sm:$0xff] %v1893
                %v1895 = vld [vmem:[%s1837 + $0xe0] sm:$0xff]
                %1896 = vst [vmem:[%s1838 + $0x160] sm:$0xff] %v1895
                %v1897 = vld [vmem:[%s1837 + $0xe8] sm:$0xff]
                %1898 = vst [vmem:[%s1838 + $0x168] sm:$0xff] %v1897
                %v1899 = vld [vmem:[%s1837 + $0xf0] sm:$0xff]
                %1900 = vst [vmem:[%s1838 + $0x170] sm:$0xff] %v1899
                %v1901 = vld [vmem:[%s1837 + $0xf8] sm:$0xff]
                %1902 = vst [vmem:[%s1838 + $0x178] sm:$0xff] %v1901
                %v1903 = vld [vmem:[%s1837 + $0x100] sm:$0xff]
                %1904 = vst [vmem:[%s1838 + $0x200] sm:$0xff] %v1903
                %v1905 = vld [vmem:[%s1837 + $0x108] sm:$0xff]
                %1906 = vst [vmem:[%s1838 + $0x208] sm:$0xff] %v1905
                %v1907 = vld [vmem:[%s1837 + $0x110] sm:$0xff]
                %1908 = vst [vmem:[%s1838 + $0x210] sm:$0xff] %v1907
                %v1909 = vld [vmem:[%s1837 + $0x118] sm:$0xff]
                %1910 = vst [vmem:[%s1838 + $0x218] sm:$0xff] %v1909
                %v1911 = vld [vmem:[%s1837 + $0x120] sm:$0xff]
                %1912 = vst [vmem:[%s1838 + $0x220] sm:$0xff] %v1911
                %v1913 = vld [vmem:[%s1837 + $0x128] sm:$0xff]
                %1914 = vst [vmem:[%s1838 + $0x228] sm:$0xff] %v1913
                %v1915 = vld [vmem:[%s1837 + $0x130] sm:$0xff]
                %1916 = vst [vmem:[%s1838 + $0x230] sm:$0xff] %v1915
                %v1917 = vld [vmem:[%s1837 + $0x138] sm:$0xff]
                %1918 = vst [vmem:[%s1838 + $0x238] sm:$0xff] %v1917
                %v1919 = vld [vmem:[%s1837 + $0x140] sm:$0xff]
                %1920 = vst [vmem:[%s1838 + $0x240] sm:$0xff] %v1919
                %v1921 = vld [vmem:[%s1837 + $0x148] sm:$0xff]
                %1922 = vst [vmem:[%s1838 + $0x248] sm:$0xff] %v1921
                %v1923 = vld [vmem:[%s1837 + $0x150] sm:$0xff]
                %1924 = vst [vmem:[%s1838 + $0x250] sm:$0xff] %v1923
                %v1925 = vld [vmem:[%s1837 + $0x158] sm:$0xff]
                %1926 = vst [vmem:[%s1838 + $0x258] sm:$0xff] %v1925
                %v1927 = vld [vmem:[%s1837 + $0x160] sm:$0xff]
                %1928 = vst [vmem:[%s1838 + $0x260] sm:$0xff] %v1927
                %v1929 = vld [vmem:[%s1837 + $0x168] sm:$0xff]
                %1930 = vst [vmem:[%s1838 + $0x268] sm:$0xff] %v1929
                %v1931 = vld [vmem:[%s1837 + $0x170] sm:$0xff]
                %1932 = vst [vmem:[%s1838 + $0x270] sm:$0xff] %v1931
                %v1933 = vld [vmem:[%s1837 + $0x178] sm:$0xff]
                %1934 = vst [vmem:[%s1838 + $0x278] sm:$0xff] %v1933
                %v1935 = vld [vmem:[%s1837 + $0x180] sm:$0xff]
                %1936 = vst [vmem:[%s1838 + $0x300] sm:$0xff] %v1935
                %v1937 = vld [vmem:[%s1837 + $0x188] sm:$0xff]
                %1938 = vst [vmem:[%s1838 + $0x308] sm:$0xff] %v1937
                %v1939 = vld [vmem:[%s1837 + $0x190] sm:$0xff]
                %1940 = vst [vmem:[%s1838 + $0x310] sm:$0xff] %v1939
                %v1941 = vld [vmem:[%s1837 + $0x198] sm:$0xff]
                %1942 = vst [vmem:[%s1838 + $0x318] sm:$0xff] %v1941
                %v1943 = vld [vmem:[%s1837 + $0x1a0] sm:$0xff]
                %1944 = vst [vmem:[%s1838 + $0x320] sm:$0xff] %v1943
                %v1945 = vld [vmem:[%s1837 + $0x1a8] sm:$0xff]
                %1946 = vst [vmem:[%s1838 + $0x328] sm:$0xff] %v1945
                %v1947 = vld [vmem:[%s1837 + $0x1b0] sm:$0xff]
                %1948 = vst [vmem:[%s1838 + $0x330] sm:$0xff] %v1947
                %v1949 = vld [vmem:[%s1837 + $0x1b8] sm:$0xff]
                %1950 = vst [vmem:[%s1838 + $0x338] sm:$0xff] %v1949
                %v1951 = vld [vmem:[%s1837 + $0x1c0] sm:$0xff]
                %1952 = vst [vmem:[%s1838 + $0x340] sm:$0xff] %v1951
                %v1953 = vld [vmem:[%s1837 + $0x1c8] sm:$0xff]
                %1954 = vst [vmem:[%s1838 + $0x348] sm:$0xff] %v1953
                %v1955 = vld [vmem:[%s1837 + $0x1d0] sm:$0xff]
                %1956 = vst [vmem:[%s1838 + $0x350] sm:$0xff] %v1955
                %v1957 = vld [vmem:[%s1837 + $0x1d8] sm:$0xff]
                %1958 = vst [vmem:[%s1838 + $0x358] sm:$0xff] %v1957
                %v1959 = vld [vmem:[%s1837 + $0x1e0] sm:$0xff]
                %1960 = vst [vmem:[%s1838 + $0x360] sm:$0xff] %v1959
                %v1961 = vld [vmem:[%s1837 + $0x1e8] sm:$0xff]
                %1962 = vst [vmem:[%s1838 + $0x368] sm:$0xff] %v1961
                %v1963 = vld [vmem:[%s1837 + $0x1f0] sm:$0xff]
                %1964 = vst [vmem:[%s1838 + $0x370] sm:$0xff] %v1963
                %v1965 = vld [vmem:[%s1837 + $0x1f8] sm:$0xff]
                %1966 = vst [vmem:[%s1838 + $0x378] sm:$0xff] %v1965
              $region61: #{upsample_forward.1} parent=55 // loop_footer
                %s1836 = sadd.s32 1, %s1832
              $region62: #{upsample_forward.1} parent=55 // loop_footer_branch
                %1831 = sbr.rel target = $region58
              $region63: #{upsample_forward.1} parent=55 // loop_exit
                _
            $region56: #{upsample_forward.1} parent=47 // pred_fallthru
              _
          $region48: #{upsample_forward.1} parent=43 // pred_fallthru
            _
          %2107 = vnop
        $region44: #{upsample_forward.1} parent=39 // pred_fallthru
          _
      $region40: #{upsample_forward.1} parent=5 // pred_fallthru
        _
      %p2108 = scmp.le.s32.totalorder 2, %s11
      // Predicated region
      $region79: #{upsample_forward.1} parent=5 // pred_check
        %p2109 = pneg %p2108
      $region80: #{upsample_forward.1} parent=5 // pred_check_branch
        %2111 = sbr.rel (%p2109) target = $region82
      $region81: #{upsample_forward.1} parent=5 // pred_region
        %s2112 = ssub.s32 %s11, 2
        // Predicated region
        $region83: #{upsample_forward.1} parent=81 // pred_check
          %p2113 = pneg %p209
        $region84: #{upsample_forward.1} parent=81 // pred_check_branch
          %2115 = sbr.rel (%p2113) target = $region86
        $region85: #{upsample_forward.1} parent=81 // pred_region
          %s2116 = sand.u32 %s194, 1
          %s2117 = sand.u32 %s194, 1
          %s2118 = smul.addr %s2117, 512
          %s2119 = scalar_lea.vmem [#allocation2], %s2118
        $region86: #{upsample_forward.1} parent=81 // pred_fallthru
          _
      $region82: #{upsample_forward.1} parent=5 // pred_fallthru
        _
    $region6: #{upsample_forward.1} parent=1 // loop_footer
      %s15 = sadd.s32 1, %s11
    $region7: #{upsample_forward.1} parent=1 // loop_footer_branch
      %10 = sbr.rel target = $region3
    $region8: #{upsample_forward.1} parent=1 // loop_exit
      _

</llo_original>
